<compile_context>
chip_gen: v7x
topology: tpu7x:2x2x1
jax: 0.10.0
libtpu: 0.0.40
codegen_flags: <defaults>
</compile_context>

<pallas_src>
import jax
import jax.numpy as jnp
import numpy as np
from jax.experimental import pallas as pl
from jax.experimental.pallas import tpu as pltpu


# ----------------------------------------------------------------------------
# Pallas kernel: one grid step == one block of B graphs.
# ----------------------------------------------------------------------------
def _gnn_layer_kernel(
    a_ref,          # (B, A_in, n, n)      adjacency block, channels-first
    x_ref,          # (B, n, x_in)         node features
    w1_ref,         # (A_in, A_out)        A_l1 weight, in SMEM (scalar FMAs)
    w_row_a_ref,    # (K, A_out)           per-node -> A_transform row term
    w_row_x1_ref,   # (K, x_out)           per-node -> X1
    w_row_cc_ref,   # (K, A_out*x_out)     per-node -> X2 folded with out_transform
    w_glob_a_ref,   # (K+1, A_out)         pooled (+bias row) -> A_transform
    w_glob_x1_ref,  # (K+1, x_out)         pooled (+bias row) -> X1
    w_glob_cc_ref,  # (K+1, A_out*x_out)   pooled (+bias row) -> X2 (folded)
    a_out_ref,      # (B, n, A_out*n)      lane-dense A_transform [b, i, o*n + j]
    x_out_ref,      # (B, n, x_out)        node-feature output
):
    B, A_in, n, _ = a_ref.shape
    A_out = w1_ref.shape[1]
    x_out = x_out_ref.shape[-1]
    f32 = jnp.float32

    ii = jax.lax.broadcasted_iota(jnp.int32, (n, n), 0)
    jj = jax.lax.broadcasted_iota(jnp.int32, (n, n), 1)
    eye = (ii == jj).astype(f32)                              # (n, n)

    # ---- single pass over the A channel slabs -------------------------------
    # Each slab is loaded exactly once; we compute the pooled statistics and
    # FMA it into all A_out base accumulators (A_l1 channel mix) in that pass.
    base = [None] * A_out
    mc_cols, dg_cols = [], []
    for c in range(A_in):
        a_c = a_ref[:, c, :, :].astype(f32)                   # (B, n, n)
        mc_cols.append(jnp.mean(a_c, axis=-1))                # (B, n)  mean over j
        dg_cols.append(jnp.sum(a_c * eye, axis=-1))           # (B, n)  A[b,c,i,i]
        for o in range(A_out):
            term = a_c * w1_ref[c, o]                         # scalar-splat FMA (SMEM)
            base[o] = term if base[o] is None else base[o] + term

    mc_node = jnp.concatenate([m[:, :, None] for m in mc_cols], axis=-1)  # (B, n, A_in)
    dg_node = jnp.concatenate([d[:, :, None] for d in dg_cols], axis=-1)  # (B, n, A_in)
    X = x_ref[...].astype(f32)                                # (B, n, x_in)

    # ---- fused small linear layers (split by output group, no lane slicing) --
    node_in = jnp.concatenate([X, mc_node, dg_node], axis=-1)  # (B, n, K)
    K = node_in.shape[-1]
    # pooled inputs = mean over nodes of node_in = [mean_X | mean_all | mean_diag],
    # plus a constant-1 column so the bias row folded into w_glob_* applies once.
    glob_in = jnp.mean(node_in, axis=1)                        # (B, K)
    glob_in = jnp.concatenate([glob_in, jnp.ones((B, 1), f32)], axis=-1)  # (B, K+1)

    node_flat = node_in.reshape(B * n, K)
    row_a = jnp.dot(node_flat, w_row_a_ref[...],
                    preferred_element_type=f32).reshape(B, n, A_out)
    row_x1 = jnp.dot(node_flat, w_row_x1_ref[...],
                     preferred_element_type=f32).reshape(B, n, x_out)
    row_cc = jnp.dot(node_flat, w_row_cc_ref[...],
                     preferred_element_type=f32).reshape(B, n, A_out * x_out)

    glob_a = jnp.dot(glob_in, w_glob_a_ref[...], preferred_element_type=f32)   # (B, A_out)
    glob_x1 = jnp.dot(glob_in, w_glob_x1_ref[...], preferred_element_type=f32) # (B, x_out)
    glob_cc = jnp.dot(glob_in, w_glob_cc_ref[...], preferred_element_type=f32) # (B, A_out*x_out)

    x1 = row_x1 + glob_x1[:, None, :]                          # (B, n, x_out)
    inv_n = jnp.asarray(1.0 / n, f32)
    # ccat[b, j, o*x_out + t'] = sum_t X2[b,j,t] * Wout[o, t, t'] / n
    ccat = (row_cc + glob_cc[:, None, :]) * inv_n              # (B, n, A_out*x_out)

    # ---- A_transform channels, lane-dense packing, fused epilogue ------------
    a_slabs, cc_slabs = [], []
    for o in range(A_out):
        r_o = row_a[:, :, o]                                   # (B, n)
        g_o = glob_a[:, o:o + 1]                               # (B, 1)
        # A_t[b,i,j,o] = base_o + row(i) + (row(j) + glob)  -- two n^2-scale adds
        a_tr_o = base[o] + r_o[:, :, None] + (r_o + g_o)[:, None, :]   # (B, n, n)
        a_slabs.append(a_tr_o)
        cc_slabs.append(ccat[:, :, o * x_out:(o + 1) * x_out])         # (B, n, x_out)

    a_cat = jnp.concatenate(a_slabs, axis=-1)                  # (B, n, A_out*n) [b,i,o*n+j]
    cc_cat = jnp.concatenate(cc_slabs, axis=1)                 # (B, A_out*n, x_out)

    # single lane-dense store of the whole A_transform block
    a_out_ref[...] = a_cat.astype(a_out_ref.dtype)

    # one batched contraction with K = A_out*n (replaces A_out tiny matmuls)
    # TODO(synk): optionally cast a_cat/cc_cat to bf16 here (f32 accumulation)
    # when the epilogue matmul is the binding unit at large n; kept f32 to stay
    # bit-close to the PyTorch reference.
    out = x1 + jnp.einsum('bij,bjt->bit', a_cat, cc_cat, preferred_element_type=f32)
    x_out_ref[...] = out.astype(x_out_ref.dtype)


# ----------------------------------------------------------------------------
# VMEM accounting (with (8,128) tile padding) + batch-block selection.
# ----------------------------------------------------------------------------
def _round_up(v, m):
    return -(-v // m) * m


def _slab_bytes(shape, itemsize=4):
    """VMEM footprint of an f32 block/temp with TPU (8,128) tiling on the last two dims."""
    shape = tuple(int(s) for s in shape)
    if len(shape) == 0:
        return itemsize
    if len(shape) == 1:
        lead, rows, cols = 1, 1, shape[0]
    else:
        rows, cols = shape[-2], shape[-1]
        lead = 1
        for s in shape[:-2]:
            lead *= s
    return lead * _round_up(rows, 8) * _round_up(cols, 128) * itemsize


def _block_vmem_bytes(B, A_in, A_out, n, x_in, x_out):
    K = x_in + 2 * A_in
    # Pipeline blocks (double-buffered by Pallas).
    blocks = 2 * (_slab_bytes((B, A_in, n, n))            # A input
                  + _slab_bytes((B, n, A_out * n))        # A_transform output
                  + _slab_bytes((B, n, x_in))             # X input
                  + _slab_bytes((B, n, x_out)))           # X output
    # Dominant in-kernel f32 temporaries.
    temps = (A_out * _slab_bytes((B, n, n))               # base accumulators
             + A_out * _slab_bytes((B, n, n))             # a_tr slabs
             + _slab_bytes((B, n, A_out * n))             # a_cat
             + 2 * _slab_bytes((B, n, n))                 # in-flight channel slab(s)
             + 2 * _slab_bytes((B, n, A_out * x_out))     # ccat + reordered copy
             + _slab_bytes((B, n, K))                     # node_in
             + 3 * _slab_bytes((B, n, x_out)))            # row_x1 / x1 / out
    return blocks + temps + (1 << 20)                     # weights + compiler scratch headroom


def _physical_vmem_bytes():
    try:
        info = pltpu.get_tpu_info()
        v = getattr(info, "vmem_capacity_bytes", None)
        if v:
            return int(v)
    except Exception:
        pass
    return 64 * 1024 * 1024  # conservative default (v7x per-core VMEM)


def _pick_batch_block(N, A_in, A_out, n, x_in, x_out, budget_bytes):
    best = 1
    for d in range(1, N + 1):
        if N % d:
            continue
        # keep >= 2 grid steps so the "parallel" axis can shard across both
        # TensorCores on dual-core chips (v7x); costs ~nothing elsewhere.
        if N >= 2 and N // d < 2:
            continue
        if _block_vmem_bytes(d, A_in, A_out, n, x_in, x_out) <= budget_bytes:
            best = d
    return best


# ----------------------------------------------------------------------------
# Wrapper: weight fusion + batch-block selection + pallas_call.
# ----------------------------------------------------------------------------
def gnn_layer_pallas(A, X, params, batch_block=None):
    """A: (N, A_in, n, n), X: (N, n, x_in). Returns (A_transform, X_out) exactly
    like the PyTorch module: (N, A_out, n, n) and (N, n, x_out)."""
    N, A_in, n, _ = A.shape
    x_in = X.shape[-1]
    wa_a, wa_x = params["wa_a"], params["wa_x"]           # (5,A_in,A_out), (2,x_in,A_out)
    wx1_x, wx1_a = params["wx1_x"], params["wx1_a"]       # (2,x_in,x_out), (4,A_in,x_out)
    wx2_x, wx2_a = params["wx2_x"], params["wx2_a"]
    A_out_c = wa_a.shape[-1]
    x_out_c = wx1_x.shape[-1]
    K = x_in + 2 * A_in
    f32 = jnp.float32

    # out_transform repacked: wout2[t, o*x_out + t'] = W_out[o*x_out + t, t']
    wout3 = params["wout"].reshape(A_out_c, x_out_c, x_out_c).astype(f32)
    wout2 = jnp.transpose(wout3, (1, 0, 2)).reshape(x_out_c, A_out_c * x_out_c)

    # per-node ("row") weights: input rows follow node_in = [X | mean_cols | diag]
    w_row_a = jnp.concatenate([wa_x[0], wa_a[3], wa_a[4]], axis=0).astype(f32)    # (K, A_out)
    w_row_x1 = jnp.concatenate([wx1_x[0], wx1_a[0], wx1_a[1]], axis=0).astype(f32)  # (K, x_out)
    w_row_x2 = jnp.concatenate([wx2_x[0], wx2_a[0], wx2_a[1]], axis=0).astype(f32)
    w_row_cc = jnp.dot(w_row_x2, wout2)                                            # (K, A_out*x_out)

    # pooled ("glob") weights: rows follow [mean_X | mean_all | mean_diag | 1 (bias)]
    w_glob_a = jnp.concatenate([wa_x[1], wa_a[1], wa_a[2], params["b_a"]], axis=0).astype(f32)
    w_glob_x1 = jnp.concatenate([wx1_x[1], wx1_a[3], wx1_a[2], params["b_x1"]], axis=0).astype(f32)
    w_glob_x2 = jnp.concatenate([wx2_x[1], wx2_a[3], wx2_a[2], params["b_x2"]], axis=0).astype(f32)
    w_glob_cc = jnp.dot(w_glob_x2, wout2)                                          # (K+1, A_out*x_out)

    w_a1 = wa_a[0].astype(f32)                                                     # (A_in, A_out)

    # ---- batch-block + VMEM budget (generation-aware) -----------------------
    phys_vmem = _physical_vmem_bytes()
    vmem_cap = min(int(phys_vmem * 3 // 4), 100 * 1024 * 1024)   # <=48 MiB on v7x, ~96-100 MiB v5e/v6e
    if batch_block is None:
        batch_block = _pick_batch_block(N, A_in, A_out_c, n, x_in, x_out_c,
                                        budget_bytes=int(vmem_cap * 0.8))
    B = batch_block
    assert N % B == 0, "batch block must divide N"
    need = _block_vmem_bytes(B, A_in, A_out_c, n, x_in, x_out_c)
    vmem_limit = int(min(vmem_cap, max(32 * 1024 * 1024, 2 * need)))

    grid = (N // B,)
    in_specs = [
        pl.BlockSpec((B, A_in, n, n), lambda b: (b, 0, 0, 0)),             # A (channels-first)
        pl.BlockSpec((B, n, x_in), lambda b: (b, 0, 0)),                   # X
        pl.BlockSpec(memory_space=pltpu.MemorySpace.SMEM),                 # A_l1 weight scalars
        pl.BlockSpec((K, A_out_c), lambda b: (0, 0)),                      # w_row_a
        pl.BlockSpec((K, x_out_c), lambda b: (0, 0)),                      # w_row_x1
        pl.BlockSpec((K, A_out_c * x_out_c), lambda b: (0, 0)),            # w_row_cc
        pl.BlockSpec((K + 1, A_out_c), lambda b: (0, 0)),                  # w_glob_a (+bias)
        pl.BlockSpec((K + 1, x_out_c), lambda b: (0, 0)),                  # w_glob_x1 (+bias)
        pl.BlockSpec((K + 1, A_out_c * x_out_c), lambda b: (0, 0)),        # w_glob_cc (+bias)
    ]
    out_specs = [
        pl.BlockSpec((B, n, A_out_c * n), lambda b: (b, 0, 0)),            # lane-dense A_transform
        pl.BlockSpec((B, n, x_out_c), lambda b: (b, 0, 0)),
    ]
    out_shape = [
        jax.ShapeDtypeStruct((N, n, A_out_c * n), jnp.float32),
        jax.ShapeDtypeStruct((N, n, x_out_c), jnp.float32),
    ]

    a_flat, x_out = pl.pallas_call(
        _gnn_layer_kernel,
        grid=grid,
        in_specs=in_specs,
        out_specs=out_specs,
        out_shape=out_shape,
        compiler_params=pltpu.CompilerParams(
            dimension_semantics=("parallel",),
            vmem_limit_bytes=vmem_limit,
        ),
    )(A, X, w_a1, w_row_a, w_row_x1, w_row_cc, w_glob_a, w_glob_x1, w_glob_cc)

    # layout plumbing only: lane-dense kernel layout [b, i, o*n + j] -> (N, A_out, n, n)
    a_tr = a_flat.reshape(N, n, A_out_c, n).transpose(0, 2, 1, 3)
    return a_tr, x_out


# ----------------------------------------------------------------------------
# Pure-JAX reference (mirrors the PyTorch forward exactly) for validation.
# ----------------------------------------------------------------------------
def gnn_layer_ref(A, X, params):
    N, A_in, n, _ = A.shape
    wa_a, wa_x = params["wa_a"], params["wa_x"]
    wx1_x, wx1_a = params["wx1_x"], params["wx1_a"]
    wx2_x, wx2_a = params["wx2_x"], params["wx2_a"]
    w_out = params["wout"]                                     # (A_out*x_out, x_out)

    lin = lambda x, w: x @ w

    diag_part = jnp.diagonal(A, axis1=-2, axis2=-1)[..., None].transpose(0, 2, 3, 1)  # (N,n,1,A_in)
    mean_diag = jnp.mean(diag_part, axis=1, keepdims=True)                            # (N,1,1,A_in)
    mean_cols = jnp.mean(A, axis=-1)[..., None].transpose(0, 2, 3, 1)                 # (N,n,1,A_in)
    mean_all = jnp.mean(mean_cols, axis=1, keepdims=True)                             # (N,1,1,A_in)
    mean_X = jnp.mean(X, axis=-2, keepdims=True)                                      # (N,1,x_in)

    A_t = lin(A.transpose(0, 2, 3, 1), wa_a[0])
    A_t = A_t + lin(mean_all, wa_a[1])
    A_t = A_t + lin(mean_cols + jnp.swapaxes(mean_cols, -2, -3), wa_a[3])
    A_t = A_t + lin(X[:, :, None, :] + X[:, None, :, :], wa_x[0])
    A_t = A_t + lin(mean_X[:, None, :, :], wa_x[1])
    A_t = A_t + params["b_a"].reshape(1, 1, 1, -1)
    A_t = A_t + lin(mean_diag, wa_a[2])
    A_t = A_t + lin(diag_part + jnp.swapaxes(diag_part, -2, -3), wa_a[4])

    def node(wx, wa, b):
        y = lin(X, wx[0]) + lin(mean_X, wx[1])
        y = y + lin(mean_cols[:, :, 0, :], wa[0]) + lin(mean_all[:, 0], wa[3])
        y = y + b.reshape(1, 1, -1)
        y = y + lin(diag_part[:, :, 0, :], wa[1]) + lin(mean_diag[:, 0], wa[2])
        return y

    X1 = node(wx1_x, wx1_a, params["b_x1"])
    X2 = node(wx2_x, wx2_a, params["b_x2"])

    out = jnp.einsum("nijs,njt->nist", A_t, X2) / n
    out = out.reshape(N, n, -1) @ w_out
    out = out + X1
    return A_t.transpose(0, 3, 1, 2), out


# ----------------------------------------------------------------------------
# Main
# ----------------------------------------------------------------------------
if __name__ == "__main__":
    # small shapes: batch N=4, A_in=3, A_out=4, x_in=5, x_out=6, n=8 nodes
    N, A_in, A_out_c, x_in, x_out_c, n = 4, 3, 4, 5, 6, 8

    key = jax.random.PRNGKey(0)
    keys = jax.random.split(key, 12)

    A = jax.random.normal(keys[0], (N, A_in, n, n), jnp.float32)
    X = jax.random.normal(keys[1], (N, n, x_in), jnp.float32)

    sc = 0.1
    params = {
        # stacked Linear weights, stored (in, out) so y = x @ W
        "wa_a": sc * jax.random.normal(keys[2], (5, A_in, A_out_c), jnp.float32),   # A_l1..A_l5
        "wa_x": sc * jax.random.normal(keys[3], (2, x_in, A_out_c), jnp.float32),   # A_l6, A_l7
        "wx1_x": sc * jax.random.normal(keys[4], (2, x_in, x_out_c), jnp.float32),  # X1_l1, X1_l2
        "wx1_a": sc * jax.random.normal(keys[5], (4, A_in, x_out_c), jnp.float32),  # X1_l3..X1_l6
        "wx2_x": sc * jax.random.normal(keys[6], (2, x_in, x_out_c), jnp.float32),  # X2_l1, X2_l2
        "wx2_a": sc * jax.random.normal(keys[7], (4, A_in, x_out_c), jnp.float32),  # X2_l3..X2_l6
        "wout": sc * jax.random.normal(keys[8], (A_out_c * x_out_c, x_out_c), jnp.float32),
        # biases are zero-initialized in the module; keep nonzero to exercise the path
        "b_a": sc * jax.random.normal(keys[9], (1, A_out_c), jnp.float32),
        "b_x1": sc * jax.random.normal(keys[10], (1, x_out_c), jnp.float32),
        "b_x2": sc * jax.random.normal(keys[11], (1, x_out_c), jnp.float32),
    }

    a_pal, x_pal = gnn_layer_pallas(A, X, params)
    jax.block_until_ready(a_pal)
    jax.block_until_ready(x_pal)

    a_ref_out, x_ref_out = gnn_layer_ref(A, X, params)

    np.testing.assert_allclose(np.asarray(a_pal), np.asarray(a_ref_out), rtol=1e-4, atol=1e-4)
    np.testing.assert_allclose(np.asarray(x_pal), np.asarray(x_ref_out), rtol=1e-4, atol=1e-4)

    print("KERNEL_OK")
</pallas_src>

<mosaic_0001>
module attributes {stable_mosaic.version = 11 : i64} {
  func.func @_gnn_layer_kernel(%arg0: i32, %arg1: memref<2x3x8x8xf32, #tpu.memory_space<vmem>>, %arg2: memref<2x8x5xf32, #tpu.memory_space<vmem>>, %arg3: memref<3x4xf32, #tpu.memory_space<smem>>, %arg4: memref<11x4xf32, #tpu.memory_space<vmem>>, %arg5: memref<11x6xf32, #tpu.memory_space<vmem>>, %arg6: memref<11x24xf32, #tpu.memory_space<vmem>>, %arg7: memref<12x4xf32, #tpu.memory_space<vmem>>, %arg8: memref<12x6xf32, #tpu.memory_space<vmem>>, %arg9: memref<12x24xf32, #tpu.memory_space<vmem>>, %arg10: memref<2x8x32xf32, #tpu.memory_space<vmem>>, %arg11: memref<2x8x6xf32, #tpu.memory_space<vmem>>) attributes {dimension_semantics = [#tpu.dimension_semantics<parallel>], iteration_bounds = array<i64: 2>, scalar_prefetch = 0 : i64, scratch_operands = 0 : i64, tpu.core_type = #tpu.core_type<tc>, window_params = [{transform_indices = @transform_0, window_bounds = array<i64: 2, 3, 8, 8>}, {transform_indices = @transform_1, window_bounds = array<i64: 2, 8, 5>}, {transform_indices = @transform_2, window_bounds = array<i64: 3, 4>}, {pipeline_mode = #tpu.pipeline_mode<synchronous>, transform_indices = @transform_3, window_bounds = array<i64: 11, 4>}, {pipeline_mode = #tpu.pipeline_mode<synchronous>, transform_indices = @transform_4, window_bounds = array<i64: 11, 6>}, {pipeline_mode = #tpu.pipeline_mode<synchronous>, transform_indices = @transform_5, window_bounds = array<i64: 11, 24>}, {pipeline_mode = #tpu.pipeline_mode<synchronous>, transform_indices = @transform_6, window_bounds = array<i64: 12, 4>}, {pipeline_mode = #tpu.pipeline_mode<synchronous>, transform_indices = @transform_7, window_bounds = array<i64: 12, 6>}, {pipeline_mode = #tpu.pipeline_mode<synchronous>, transform_indices = @transform_8, window_bounds = array<i64: 12, 24>}, {transform_indices = @transform_9, window_bounds = array<i64: 2, 8, 32>}, {transform_indices = @transform_10, window_bounds = array<i64: 2, 8, 6>}]} {
    %0 = tpu.iota {dimensions = array<i32: 0>} : vector<8x8xi32>
    %1 = tpu.iota {dimensions = array<i32: 1>} : vector<8x8xi32>
    %2 = arith.cmpi eq, %0, %1 : vector<8x8xi32>
    %3 = arith.extui %2 : vector<8x8xi1> to vector<8x8xi32>
    %4 = arith.sitofp %3 : vector<8x8xi32> to vector<8x8xf32>
    %c0 = arith.constant 0 : index
    %c0_0 = arith.constant 0 : index
    %c0_1 = arith.constant 0 : index
    %c0_2 = arith.constant 0 : index
    %5 = vector.load %arg1[%c0, %c0_0, %c0_1, %c0_2] : memref<2x3x8x8xf32, #tpu.memory_space<vmem>>, vector<2x1x8x8xf32>
    %6 = vector.shape_cast %5 : vector<2x1x8x8xf32> to vector<2x8x8xf32>
    %cst = arith.constant dense<0.000000e+00> : vector<2x8xf32>
    %7 = vector.multi_reduction <add>, %6, %cst [2] : vector<2x8x8xf32> to vector<2x8xf32>
    %cst_3 = arith.constant 8.000000e+00 : f32
    %8 = vector.broadcast %cst_3 : f32 to vector<2x8xf32>
    %9 = arith.divf %7, %8 : vector<2x8xf32>
    %10 = vector.shape_cast %4 : vector<8x8xf32> to vector<1x8x8xf32>
    %11 = vector.broadcast %10 : vector<1x8x8xf32> to vector<2x8x8xf32>
    %12 = arith.mulf %6, %11 : vector<2x8x8xf32>
    %cst_4 = arith.constant dense<0.000000e+00> : vector<2x8xf32>
    %13 = vector.multi_reduction <add>, %12, %cst_4 [2] : vector<2x8x8xf32> to vector<2x8xf32>
    %c0_5 = arith.constant 0 : index
    %c0_6 = arith.constant 0 : index
    %14 = memref.load %arg3[%c0_5, %c0_6] : memref<3x4xf32, #tpu.memory_space<smem>>
    %15 = vector.broadcast %14 : f32 to vector<2x8x8xf32>
    %16 = arith.mulf %6, %15 : vector<2x8x8xf32>
    %c0_7 = arith.constant 0 : index
    %c1 = arith.constant 1 : index
    %17 = memref.load %arg3[%c0_7, %c1] : memref<3x4xf32, #tpu.memory_space<smem>>
    %18 = vector.broadcast %17 : f32 to vector<2x8x8xf32>
    %19 = arith.mulf %6, %18 : vector<2x8x8xf32>
    %c0_8 = arith.constant 0 : index
    %c2 = arith.constant 2 : index
    %20 = memref.load %arg3[%c0_8, %c2] : memref<3x4xf32, #tpu.memory_space<smem>>
    %21 = vector.broadcast %20 : f32 to vector<2x8x8xf32>
    %22 = arith.mulf %6, %21 : vector<2x8x8xf32>
    %c0_9 = arith.constant 0 : index
    %c3 = arith.constant 3 : index
    %23 = memref.load %arg3[%c0_9, %c3] : memref<3x4xf32, #tpu.memory_space<smem>>
    %24 = vector.broadcast %23 : f32 to vector<2x8x8xf32>
    %25 = arith.mulf %6, %24 : vector<2x8x8xf32>
    %c0_10 = arith.constant 0 : index
    %c1_11 = arith.constant 1 : index
    %c0_12 = arith.constant 0 : index
    %c0_13 = arith.constant 0 : index
    %26 = vector.load %arg1[%c0_10, %c1_11, %c0_12, %c0_13] : memref<2x3x8x8xf32, #tpu.memory_space<vmem>>, vector<2x1x8x8xf32>
    %27 = vector.shape_cast %26 : vector<2x1x8x8xf32> to vector<2x8x8xf32>
    %cst_14 = arith.constant dense<0.000000e+00> : vector<2x8xf32>
    %28 = vector.multi_reduction <add>, %27, %cst_14 [2] : vector<2x8x8xf32> to vector<2x8xf32>
    %cst_15 = arith.constant 8.000000e+00 : f32
    %29 = vector.broadcast %cst_15 : f32 to vector<2x8xf32>
    %30 = arith.divf %28, %29 : vector<2x8xf32>
    %31 = vector.shape_cast %4 : vector<8x8xf32> to vector<1x8x8xf32>
    %32 = vector.broadcast %31 : vector<1x8x8xf32> to vector<2x8x8xf32>
    %33 = arith.mulf %27, %32 : vector<2x8x8xf32>
    %cst_16 = arith.constant dense<0.000000e+00> : vector<2x8xf32>
    %34 = vector.multi_reduction <add>, %33, %cst_16 [2] : vector<2x8x8xf32> to vector<2x8xf32>
    %c1_17 = arith.constant 1 : index
    %c0_18 = arith.constant 0 : index
    %35 = memref.load %arg3[%c1_17, %c0_18] : memref<3x4xf32, #tpu.memory_space<smem>>
    %36 = vector.broadcast %35 : f32 to vector<2x8x8xf32>
    %37 = arith.mulf %27, %36 : vector<2x8x8xf32>
    %38 = arith.addf %16, %37 : vector<2x8x8xf32>
    %c1_19 = arith.constant 1 : index
    %c1_20 = arith.constant 1 : index
    %39 = memref.load %arg3[%c1_19, %c1_20] : memref<3x4xf32, #tpu.memory_space<smem>>
    %40 = vector.broadcast %39 : f32 to vector<2x8x8xf32>
    %41 = arith.mulf %27, %40 : vector<2x8x8xf32>
    %42 = arith.addf %19, %41 : vector<2x8x8xf32>
    %c1_21 = arith.constant 1 : index
    %c2_22 = arith.constant 2 : index
    %43 = memref.load %arg3[%c1_21, %c2_22] : memref<3x4xf32, #tpu.memory_space<smem>>
    %44 = vector.broadcast %43 : f32 to vector<2x8x8xf32>
    %45 = arith.mulf %27, %44 : vector<2x8x8xf32>
    %46 = arith.addf %22, %45 : vector<2x8x8xf32>
    %c1_23 = arith.constant 1 : index
    %c3_24 = arith.constant 3 : index
    %47 = memref.load %arg3[%c1_23, %c3_24] : memref<3x4xf32, #tpu.memory_space<smem>>
    %48 = vector.broadcast %47 : f32 to vector<2x8x8xf32>
    %49 = arith.mulf %27, %48 : vector<2x8x8xf32>
    %50 = arith.addf %25, %49 : vector<2x8x8xf32>
    %c0_25 = arith.constant 0 : index
    %c2_26 = arith.constant 2 : index
    %c0_27 = arith.constant 0 : index
    %c0_28 = arith.constant 0 : index
    %51 = vector.load %arg1[%c0_25, %c2_26, %c0_27, %c0_28] : memref<2x3x8x8xf32, #tpu.memory_space<vmem>>, vector<2x1x8x8xf32>
    %52 = vector.shape_cast %51 : vector<2x1x8x8xf32> to vector<2x8x8xf32>
    %cst_29 = arith.constant dense<0.000000e+00> : vector<2x8xf32>
    %53 = vector.multi_reduction <add>, %52, %cst_29 [2] : vector<2x8x8xf32> to vector<2x8xf32>
    %cst_30 = arith.constant 8.000000e+00 : f32
    %54 = vector.broadcast %cst_30 : f32 to vector<2x8xf32>
    %55 = arith.divf %53, %54 : vector<2x8xf32>
    %56 = vector.shape_cast %4 : vector<8x8xf32> to vector<1x8x8xf32>
    %57 = vector.broadcast %56 : vector<1x8x8xf32> to vector<2x8x8xf32>
    %58 = arith.mulf %52, %57 : vector<2x8x8xf32>
    %cst_31 = arith.constant dense<0.000000e+00> : vector<2x8xf32>
    %59 = vector.multi_reduction <add>, %58, %cst_31 [2] : vector<2x8x8xf32> to vector<2x8xf32>
    %c2_32 = arith.constant 2 : index
    %c0_33 = arith.constant 0 : index
    %60 = memref.load %arg3[%c2_32, %c0_33] : memref<3x4xf32, #tpu.memory_space<smem>>
    %61 = vector.broadcast %60 : f32 to vector<2x8x8xf32>
    %62 = arith.mulf %52, %61 : vector<2x8x8xf32>
    %63 = arith.addf %38, %62 : vector<2x8x8xf32>
    %c2_34 = arith.constant 2 : index
    %c1_35 = arith.constant 1 : index
    %64 = memref.load %arg3[%c2_34, %c1_35] : memref<3x4xf32, #tpu.memory_space<smem>>
    %65 = vector.broadcast %64 : f32 to vector<2x8x8xf32>
    %66 = arith.mulf %52, %65 : vector<2x8x8xf32>
    %67 = arith.addf %42, %66 : vector<2x8x8xf32>
    %c2_36 = arith.constant 2 : index
    %c2_37 = arith.constant 2 : index
    %68 = memref.load %arg3[%c2_36, %c2_37] : memref<3x4xf32, #tpu.memory_space<smem>>
    %69 = vector.broadcast %68 : f32 to vector<2x8x8xf32>
    %70 = arith.mulf %52, %69 : vector<2x8x8xf32>
    %71 = arith.addf %46, %70 : vector<2x8x8xf32>
    %c2_38 = arith.constant 2 : index
    %c3_39 = arith.constant 3 : index
    %72 = memref.load %arg3[%c2_38, %c3_39] : memref<3x4xf32, #tpu.memory_space<smem>>
    %73 = vector.broadcast %72 : f32 to vector<2x8x8xf32>
    %74 = arith.mulf %52, %73 : vector<2x8x8xf32>
    %75 = arith.addf %50, %74 : vector<2x8x8xf32>
    %76 = vector.shape_cast %9 : vector<2x8xf32> to vector<2x8x1xf32>
    %77 = vector.shape_cast %30 : vector<2x8xf32> to vector<2x8x1xf32>
    %78 = vector.shape_cast %55 : vector<2x8xf32> to vector<2x8x1xf32>
    %79 = tpu.concatenate %76, %77, %78 in 2 : vector<2x8x1xf32>, vector<2x8x1xf32>, vector<2x8x1xf32> -> vector<2x8x3xf32>
    %80 = vector.shape_cast %13 : vector<2x8xf32> to vector<2x8x1xf32>
    %81 = vector.shape_cast %34 : vector<2x8xf32> to vector<2x8x1xf32>
    %82 = vector.shape_cast %59 : vector<2x8xf32> to vector<2x8x1xf32>
    %83 = tpu.concatenate %80, %81, %82 in 2 : vector<2x8x1xf32>, vector<2x8x1xf32>, vector<2x8x1xf32> -> vector<2x8x3xf32>
    %c0_40 = arith.constant 0 : index
    %c0_41 = arith.constant 0 : index
    %c0_42 = arith.constant 0 : index
    %84 = vector.load %arg2[%c0_40, %c0_41, %c0_42] : memref<2x8x5xf32, #tpu.memory_space<vmem>>, vector<2x8x5xf32>
    %85 = tpu.concatenate %84, %79, %83 in 2 : vector<2x8x5xf32>, vector<2x8x3xf32>, vector<2x8x3xf32> -> vector<2x8x11xf32>
    %cst_43 = arith.constant dense<0.000000e+00> : vector<2x11xf32>
    %86 = vector.multi_reduction <add>, %85, %cst_43 [1] : vector<2x8x11xf32> to vector<2x11xf32>
    %cst_44 = arith.constant 8.000000e+00 : f32
    %87 = vector.broadcast %cst_44 : f32 to vector<2x11xf32>
    %88 = arith.divf %86, %87 : vector<2x11xf32>
    %cst_45 = arith.constant 1.000000e+00 : f32
    %89 = vector.broadcast %cst_45 : f32 to vector<2x1xf32>
    %90 = tpu.concatenate %88, %89 in 1 : vector<2x11xf32>, vector<2x1xf32> -> vector<2x12xf32>
    %91 = vector.shape_cast %85 : vector<2x8x11xf32> to vector<16x11xf32>
    %c0_46 = arith.constant 0 : index
    %c0_47 = arith.constant 0 : index
    %92 = vector.load %arg4[%c0_46, %c0_47] : memref<11x4xf32, #tpu.memory_space<vmem>>, vector<11x4xf32>
    %cst_48 = arith.constant dense<0.000000e+00> : vector<16x4xf32>
    %93 = tpu.matmul %91, %92, %cst_48 {dimension_numbers = #tpu.dot_dimension_numbers<[1], [0], [0], [1], [0, 0, 1, 1], [], []>} : vector<16x11xf32>, vector<11x4xf32>, vector<16x4xf32> -> vector<16x4xf32>
    %94 = vector.shape_cast %93 : vector<16x4xf32> to vector<2x8x4xf32>
    %c0_49 = arith.constant 0 : index
    %c0_50 = arith.constant 0 : index
    %95 = vector.load %arg5[%c0_49, %c0_50] : memref<11x6xf32, #tpu.memory_space<vmem>>, vector<11x6xf32>
    %cst_51 = arith.constant dense<0.000000e+00> : vector<16x6xf32>
    %96 = tpu.matmul %91, %95, %cst_51 {dimension_numbers = #tpu.dot_dimension_numbers<[1], [0], [0], [1], [0, 0, 1, 1], [], []>} : vector<16x11xf32>, vector<11x6xf32>, vector<16x6xf32> -> vector<16x6xf32>
    %97 = vector.shape_cast %96 : vector<16x6xf32> to vector<2x8x6xf32>
    %c0_52 = arith.constant 0 : index
    %c0_53 = arith.constant 0 : index
    %98 = vector.load %arg6[%c0_52, %c0_53] : memref<11x24xf32, #tpu.memory_space<vmem>>, vector<11x24xf32>
    %cst_54 = arith.constant dense<0.000000e+00> : vector<16x24xf32>
    %99 = tpu.matmul %91, %98, %cst_54 {dimension_numbers = #tpu.dot_dimension_numbers<[1], [0], [0], [1], [0, 0, 1, 1], [], []>} : vector<16x11xf32>, vector<11x24xf32>, vector<16x24xf32> -> vector<16x24xf32>
    %100 = vector.shape_cast %99 : vector<16x24xf32> to vector<2x8x24xf32>
    %c0_55 = arith.constant 0 : index
    %c0_56 = arith.constant 0 : index
    %101 = vector.load %arg7[%c0_55, %c0_56] : memref<12x4xf32, #tpu.memory_space<vmem>>, vector<12x4xf32>
    %cst_57 = arith.constant dense<0.000000e+00> : vector<2x4xf32>
    %102 = tpu.matmul %90, %101, %cst_57 {dimension_numbers = #tpu.dot_dimension_numbers<[1], [0], [0], [1], [0, 0, 1, 1], [], []>} : vector<2x12xf32>, vector<12x4xf32>, vector<2x4xf32> -> vector<2x4xf32>
    %c0_58 = arith.constant 0 : index
    %c0_59 = arith.constant 0 : index
    %103 = vector.load %arg8[%c0_58, %c0_59] : memref<12x6xf32, #tpu.memory_space<vmem>>, vector<12x6xf32>
    %cst_60 = arith.constant dense<0.000000e+00> : vector<2x6xf32>
    %104 = tpu.matmul %90, %103, %cst_60 {dimension_numbers = #tpu.dot_dimension_numbers<[1], [0], [0], [1], [0, 0, 1, 1], [], []>} : vector<2x12xf32>, vector<12x6xf32>, vector<2x6xf32> -> vector<2x6xf32>
    %c0_61 = arith.constant 0 : index
    %c0_62 = arith.constant 0 : index
    %105 = vector.load %arg9[%c0_61, %c0_62] : memref<12x24xf32, #tpu.memory_space<vmem>>, vector<12x24xf32>
    %cst_63 = arith.constant dense<0.000000e+00> : vector<2x24xf32>
    %106 = tpu.matmul %90, %105, %cst_63 {dimension_numbers = #tpu.dot_dimension_numbers<[1], [0], [0], [1], [0, 0, 1, 1], [], []>} : vector<2x12xf32>, vector<12x24xf32>, vector<2x24xf32> -> vector<2x24xf32>
    %107 = vector.shape_cast %104 : vector<2x6xf32> to vector<2x1x6xf32>
    %108 = vector.broadcast %107 : vector<2x1x6xf32> to vector<2x8x6xf32>
    %109 = arith.addf %97, %108 : vector<2x8x6xf32>
    %110 = vector.shape_cast %106 : vector<2x24xf32> to vector<2x1x24xf32>
    %111 = vector.broadcast %110 : vector<2x1x24xf32> to vector<2x8x24xf32>
    %112 = arith.addf %100, %111 : vector<2x8x24xf32>
    %cst_64 = arith.constant 1.250000e-01 : f32
    %113 = vector.broadcast %cst_64 : f32 to vector<2x8x24xf32>
    %114 = arith.mulf %112, %113 : vector<2x8x24xf32>
    %115 = vector.extract_strided_slice %94 {offsets = [0, 0, 0], sizes = [2, 8, 1], strides = [1, 1, 1]} : vector<2x8x4xf32> to vector<2x8x1xf32>
    %116 = vector.shape_cast %115 : vector<2x8x1xf32> to vector<2x8xf32>
    %117 = vector.extract_strided_slice %102 {offsets = [0, 0], sizes = [2, 1], strides = [1, 1]} : vector<2x4xf32> to vector<2x1xf32>
    %118 = vector.shape_cast %116 : vector<2x8xf32> to vector<2x8x1xf32>
    %119 = vector.broadcast %118 : vector<2x8x1xf32> to vector<2x8x8xf32>
    %120 = arith.addf %63, %119 : vector<2x8x8xf32>
    %121 = vector.broadcast %117 : vector<2x1xf32> to vector<2x8xf32>
    %122 = arith.addf %116, %121 : vector<2x8xf32>
    %123 = vector.shape_cast %122 : vector<2x8xf32> to vector<2x1x8xf32>
    %124 = vector.broadcast %123 : vector<2x1x8xf32> to vector<2x8x8xf32>
    %125 = arith.addf %120, %124 : vector<2x8x8xf32>
    %126 = vector.extract_strided_slice %114 {offsets = [0, 0, 0], sizes = [2, 8, 6], strides = [1, 1, 1]} : vector<2x8x24xf32> to vector<2x8x6xf32>
    %127 = vector.extract_strided_slice %94 {offsets = [0, 0, 1], sizes = [2, 8, 1], strides = [1, 1, 1]} : vector<2x8x4xf32> to vector<2x8x1xf32>
    %128 = vector.shape_cast %127 : vector<2x8x1xf32> to vector<2x8xf32>
    %129 = vector.extract_strided_slice %102 {offsets = [0, 1], sizes = [2, 1], strides = [1, 1]} : vector<2x4xf32> to vector<2x1xf32>
    %130 = vector.shape_cast %128 : vector<2x8xf32> to vector<2x8x1xf32>
    %131 = vector.broadcast %130 : vector<2x8x1xf32> to vector<2x8x8xf32>
    %132 = arith.addf %67, %131 : vector<2x8x8xf32>
    %133 = vector.broadcast %129 : vector<2x1xf32> to vector<2x8xf32>
    %134 = arith.addf %128, %133 : vector<2x8xf32>
    %135 = vector.shape_cast %134 : vector<2x8xf32> to vector<2x1x8xf32>
    %136 = vector.broadcast %135 : vector<2x1x8xf32> to vector<2x8x8xf32>
    %137 = arith.addf %132, %136 : vector<2x8x8xf32>
    %138 = vector.extract_strided_slice %114 {offsets = [0, 0, 6], sizes = [2, 8, 6], strides = [1, 1, 1]} : vector<2x8x24xf32> to vector<2x8x6xf32>
    %139 = vector.extract_strided_slice %94 {offsets = [0, 0, 2], sizes = [2, 8, 1], strides = [1, 1, 1]} : vector<2x8x4xf32> to vector<2x8x1xf32>
    %140 = vector.shape_cast %139 : vector<2x8x1xf32> to vector<2x8xf32>
    %141 = vector.extract_strided_slice %102 {offsets = [0, 2], sizes = [2, 1], strides = [1, 1]} : vector<2x4xf32> to vector<2x1xf32>
    %142 = vector.shape_cast %140 : vector<2x8xf32> to vector<2x8x1xf32>
    %143 = vector.broadcast %142 : vector<2x8x1xf32> to vector<2x8x8xf32>
    %144 = arith.addf %71, %143 : vector<2x8x8xf32>
    %145 = vector.broadcast %141 : vector<2x1xf32> to vector<2x8xf32>
    %146 = arith.addf %140, %145 : vector<2x8xf32>
    %147 = vector.shape_cast %146 : vector<2x8xf32> to vector<2x1x8xf32>
    %148 = vector.broadcast %147 : vector<2x1x8xf32> to vector<2x8x8xf32>
    %149 = arith.addf %144, %148 : vector<2x8x8xf32>
    %150 = vector.extract_strided_slice %114 {offsets = [0, 0, 12], sizes = [2, 8, 6], strides = [1, 1, 1]} : vector<2x8x24xf32> to vector<2x8x6xf32>
    %151 = vector.extract_strided_slice %94 {offsets = [0, 0, 3], sizes = [2, 8, 1], strides = [1, 1, 1]} : vector<2x8x4xf32> to vector<2x8x1xf32>
    %152 = vector.shape_cast %151 : vector<2x8x1xf32> to vector<2x8xf32>
    %153 = vector.extract_strided_slice %102 {offsets = [0, 3], sizes = [2, 1], strides = [1, 1]} : vector<2x4xf32> to vector<2x1xf32>
    %154 = vector.shape_cast %152 : vector<2x8xf32> to vector<2x8x1xf32>
    %155 = vector.broadcast %154 : vector<2x8x1xf32> to vector<2x8x8xf32>
    %156 = arith.addf %75, %155 : vector<2x8x8xf32>
    %157 = vector.broadcast %153 : vector<2x1xf32> to vector<2x8xf32>
    %158 = arith.addf %152, %157 : vector<2x8xf32>
    %159 = vector.shape_cast %158 : vector<2x8xf32> to vector<2x1x8xf32>
    %160 = vector.broadcast %159 : vector<2x1x8xf32> to vector<2x8x8xf32>
    %161 = arith.addf %156, %160 : vector<2x8x8xf32>
    %162 = vector.extract_strided_slice %114 {offsets = [0, 0, 18], sizes = [2, 8, 6], strides = [1, 1, 1]} : vector<2x8x24xf32> to vector<2x8x6xf32>
    %163 = tpu.concatenate %125, %137, %149, %161 in 2 : vector<2x8x8xf32>, vector<2x8x8xf32>, vector<2x8x8xf32>, vector<2x8x8xf32> -> vector<2x8x32xf32>
    %164 = tpu.concatenate %126, %138, %150, %162 in 1 : vector<2x8x6xf32>, vector<2x8x6xf32>, vector<2x8x6xf32>, vector<2x8x6xf32> -> vector<2x32x6xf32>
    %c0_65 = arith.constant 0 : index
    %c0_66 = arith.constant 0 : index
    %c0_67 = arith.constant 0 : index
    %165 = vector.load %arg10[%c0_65, %c0_66, %c0_67] : memref<2x8x32xf32, #tpu.memory_space<vmem>>, vector<2x8x32xf32>
    tpu.vector_store %arg10[%c0_65, %c0_66, %c0_67], %163 {strides = array<i32>} : memref<2x8x32xf32, #tpu.memory_space<vmem>>, vector<2x8x32xf32>,
    "tpu.trace_start"() <{level = 10 : i32, message = "bij,bjt->bit"}> : () -> ()
    %cst_68 = arith.constant dense<0.000000e+00> : vector<2x8x6xf32>
    %166 = tpu.matmul %163, %164, %cst_68 {dimension_numbers = #tpu.dot_dimension_numbers<[2], [1], [1], [2], [0, 0, 0, 1, 1, 2], [0], [0]>} : vector<2x8x32xf32>, vector<2x32x6xf32>, vector<2x8x6xf32> -> vector<2x8x6xf32>
    "tpu.trace_stop"() : () -> ()
    %167 = arith.addf %109, %166 : vector<2x8x6xf32>
    %c0_69 = arith.constant 0 : index
    %c0_70 = arith.constant 0 : index
    %c0_71 = arith.constant 0 : index
    %168 = vector.load %arg11[%c0_69, %c0_70, %c0_71] : memref<2x8x6xf32, #tpu.memory_space<vmem>>, vector<2x8x6xf32>
    tpu.vector_store %arg11[%c0_69, %c0_70, %c0_71], %167 {strides = array<i32>} : memref<2x8x6xf32, #tpu.memory_space<vmem>>, vector<2x8x6xf32>,
    return
  }
  func.func @transform_0(%arg0: i32) -> (i32, i32, i32, i32) {
    %c0_i32 = arith.constant 0 : i32
    %c0_i32_0 = arith.constant 0 : i32
    %c0_i32_1 = arith.constant 0 : i32
    %c0_i32_2 = arith.constant 0 : i32
    return %arg0, %c0_i32, %c0_i32_0, %c0_i32_1 : i32, i32, i32, i32
  }
  func.func @transform_1(%arg0: i32) -> (i32, i32, i32) {
    %c0_i32 = arith.constant 0 : i32
    %c0_i32_0 = arith.constant 0 : i32
    %c0_i32_1 = arith.constant 0 : i32
    return %arg0, %c0_i32, %c0_i32_0 : i32, i32, i32
  }
  func.func @transform_2(%arg0: i32) -> (i32, i32) {
    %c0_i32 = arith.constant 0 : i32
    %c0_i32_0 = arith.constant 0 : i32
    %c0_i32_1 = arith.constant 0 : i32
    return %c0_i32, %c0_i32_0 : i32, i32
  }
  func.func @transform_3(%arg0: i32) -> (i32, i32) {
    %c0_i32 = arith.constant 0 : i32
    %c0_i32_0 = arith.constant 0 : i32
    %c0_i32_1 = arith.constant 0 : i32
    return %c0_i32, %c0_i32_0 : i32, i32
  }
  func.func @transform_4(%arg0: i32) -> (i32, i32) {
    %c0_i32 = arith.constant 0 : i32
    %c0_i32_0 = arith.constant 0 : i32
    %c0_i32_1 = arith.constant 0 : i32
    return %c0_i32, %c0_i32_0 : i32, i32
  }
  func.func @transform_5(%arg0: i32) -> (i32, i32) {
    %c0_i32 = arith.constant 0 : i32
    %c0_i32_0 = arith.constant 0 : i32
    %c0_i32_1 = arith.constant 0 : i32
    return %c0_i32, %c0_i32_0 : i32, i32
  }
  func.func @transform_6(%arg0: i32) -> (i32, i32) {
    %c0_i32 = arith.constant 0 : i32
    %c0_i32_0 = arith.constant 0 : i32
    %c0_i32_1 = arith.constant 0 : i32
    return %c0_i32, %c0_i32_0 : i32, i32
  }
  func.func @transform_7(%arg0: i32) -> (i32, i32) {
    %c0_i32 = arith.constant 0 : i32
    %c0_i32_0 = arith.constant 0 : i32
    %c0_i32_1 = arith.constant 0 : i32
    return %c0_i32, %c0_i32_0 : i32, i32
  }
  func.func @transform_8(%arg0: i32) -> (i32, i32) {
    %c0_i32 = arith.constant 0 : i32
    %c0_i32_0 = arith.constant 0 : i32
    %c0_i32_1 = arith.constant 0 : i32
    return %c0_i32, %c0_i32_0 : i32, i32
  }
  func.func @transform_9(%arg0: i32) -> (i32, i32, i32) {
    %c0_i32 = arith.constant 0 : i32
    %c0_i32_0 = arith.constant 0 : i32
    %c0_i32_1 = arith.constant 0 : i32
    return %arg0, %c0_i32, %c0_i32_0 : i32, i32, i32
  }
  func.func @transform_10(%arg0: i32) -> (i32, i32, i32) {
    %c0_i32 = arith.constant 0 : i32
    %c0_i32_0 = arith.constant 0 : i32
    %c0_i32_1 = arith.constant 0 : i32
    return %arg0, %c0_i32, %c0_i32_0 : i32, i32, i32
  }
}

</mosaic_0001>

<llo_original>
// kernel: tpu_custom_call.1
$region0: #{tpu_custom_call.1}
  #allocation0 [shape = 'u32[]', space=smem, size = 0x4, offset = 0x4, fixed_abs, tag = 'smem constant byte address 0x4 - core index']
  #allocation1 [shape = 'u32[144,128]{1,0:T(1,128)}', space=vmem, size = 0x12000, scoped, tag = 'internal scratch']
  %s0 = inlined_call_operand.vmem [shape: f32[4,3,8,8], index: 0, kind: input, shape index: {}]
  %s1 = inlined_call_operand.vmem [shape: f32[4,8,5], index: 1, kind: input, shape index: {}]
  %s2 = inlined_call_operand.hbm [shape: f32[3,4], index: 2, kind: input, shape index: {}]
  %s3 = inlined_call_operand.vmem [shape: f32[11,4], index: 3, kind: input, shape index: {}]
  %s4 = inlined_call_operand.vmem [shape: f32[11,6], index: 4, kind: input, shape index: {}]
  %s5 = inlined_call_operand.vmem [shape: f32[11,24], index: 5, kind: input, shape index: {}]
  %s6 = inlined_call_operand.vmem [shape: f32[12,4], index: 6, kind: input, shape index: {}]
  %s7 = inlined_call_operand.vmem [shape: f32[12,6], index: 7, kind: input, shape index: {}]
  %s8 = inlined_call_operand.vmem [shape: f32[12,24], index: 8, kind: input, shape index: {}]
  %s9 = inlined_call_operand.hbm [shape: f32[4,8,32], index: 9, kind: output, shape index: {0}]
  %s10 = inlined_call_operand.vmem [shape: f32[4,8,6], index: 10, kind: output, shape index: {1}]
  %11 = xla_tuple %s9, %s10
  %s12 = sld [smem:[#allocation0]]
  $region81: #{tpu_custom_call.1} parent=0
    _
  %s14 = ssub.s32 1, %s12
  %s15 = scalar_select 0, %s14, %s12
  $region1: #{tpu_custom_call.1} parent=0
    #allocation2 [shape = 'u8[2048]{0}', space=smem, size = 0x800, scoped, tag = 'input window, operand 2, single buffered']
    #allocation3 [shape = 's32[2]{0}', space=sflag, size = 0x8, scoped, tag = 'scoped memory for tpu_custom_call.1']
    #allocation4 [shape = 's32[2]{0}', space=sflag, size = 0x8, scoped, tag = 'scoped memory for tpu_custom_call.1']
    #allocation5 [shape = 'u8[16384]{0}', space=vmem, size = 0x4000, scoped, tag = 'output window, operand 0']
    %16 = vsyncpa [#allocation4], 0
    %17 = vsyncpa [#allocation3], 0
    %s18 = scalar_lea.sflag [#allocation3], 1
    %19 = vsyncpa %s18, 0
    loop: start=0, step=1, limit=4
    $region2: #{tpu_custom_call.1} parent=1 // loop_pre_header
      _
    $region3: #{tpu_custom_call.1} parent=1 // loop_header
      %s21 = sphi 0, %s25
      %p22 = scmp.ge.s32.totalorder %s21, 4
      %s31 = sphi 0, %s33
      %s34 = sphi 0, %s31
      %s35 = sphi 0, %s34
      %s51 = sphi 0, %s35
      %s57 = sphi 0, %s59
      %s60 = sphi 0, %s57
      %s61 = sphi 0, %s60
      %s77 = sphi 0, %s61
      %s81 = sphi 0, %s81
      %s83 = sphi 0, %s81
      %s84 = sphi 0, %s83
      %s98 = sphi 0, %s84
      %s102 = sphi 0, %s102
      %s104 = sphi 0, %s102
      %s105 = sphi 0, %s104
      %s119 = sphi 0, %s105
      %s123 = sphi 0, %s123
      %s125 = sphi 0, %s123
      %s126 = sphi 0, %s125
      %s140 = sphi 0, %s126
      %s144 = sphi 0, %s144
      %s146 = sphi 0, %s144
      %s147 = sphi 0, %s146
      %s161 = sphi 0, %s147
      %s165 = sphi 0, %s165
      %s167 = sphi 0, %s165
      %s168 = sphi 0, %s167
      %s182 = sphi 0, %s168
      %s186 = sphi 0, %s186
      %s188 = sphi 0, %s186
      %s189 = sphi 0, %s188
      %s203 = sphi 0, %s189
      %s207 = sphi 0, %s207
      %s209 = sphi 0, %s207
      %s210 = sphi 0, %s209
      %s224 = sphi 0, %s210
      %s230 = sphi 0, %s232
      %s233 = sphi 0, %s230
      %s234 = sphi 0, %s233
      %s250 = sphi 0, %s234
      %s256 = sphi 0, %s258
      %s259 = sphi 0, %s256
      %s260 = sphi 0, %s259
      %s276 = sphi 0, %s260
    $region4: #{tpu_custom_call.1} parent=1 // loop_header_branch
      %24 = sbr.rel (%p22) target = $region8
    $region5: #{tpu_custom_call.1} parent=1 // loop_body
      %s26 = ssub.s32 %s21, 1
      %s27 = ssub.s32 %s21, 2
      %s28 = sadd.s32 %s21, 1
      %s29 = ssub.s32 %s21, %s28
      %p30 = scmp.eq.s32.totalorder %s29, 0
      %s32 = sadd.s32 %s31, 1
      %s33 = scalar_select %p30, %s31, %s32
      %p36 = pneg %p30
      %p37 = scmp.eq.s32.totalorder %s21, 1
      %p38 = por %p36, %p37
      %p39 = scmp.ne.s32.totalorder %s31, %s34
      %p40 = scmp.eq.s32.totalorder %s21, 0
      %p41 = por %p39, %p40
      %p42 = scmp.ne.s32.totalorder %s31, %s34
      %p43 = scmp.eq.s32.totalorder %s26, 1
      %p44 = por %p42, %p43
      %p45 = scmp.ne.s32.totalorder %s34, %s35
      %p46 = scmp.eq.s32.totalorder %s26, 0
      %p47 = por %p45, %p46
      %p48 = scmp.ne.s32.totalorder %s34, %s35
      %p49 = scmp.eq.s32.totalorder %s27, 1
      %p50 = por %p48, %p49
      %p52 = scmp.ne.s32.totalorder %s35, %s51
      %p53 = scmp.eq.s32.totalorder %s27, 0
      %p54 = por %p52, %p53
      %s55 = ssub.s32 %s21, %s28
      %p56 = scmp.eq.s32.totalorder %s55, 0
      %s58 = sadd.s32 %s57, 1
      %s59 = scalar_select %p56, %s57, %s58
      %p62 = pneg %p56
      %p63 = scmp.eq.s32.totalorder %s21, 1
      %p64 = por %p62, %p63
      %p65 = scmp.ne.s32.totalorder %s57, %s60
      %p66 = scmp.eq.s32.totalorder %s21, 0
      %p67 = por %p65, %p66
      %p68 = scmp.ne.s32.totalorder %s57, %s60
      %p69 = scmp.eq.s32.totalorder %s26, 1
      %p70 = por %p68, %p69
      %p71 = scmp.ne.s32.totalorder %s60, %s61
      %p72 = scmp.eq.s32.totalorder %s26, 0
      %p73 = por %p71, %p72
      %p74 = scmp.ne.s32.totalorder %s60, %s61
      %p75 = scmp.eq.s32.totalorder %s27, 1
      %p76 = por %p74, %p75
      %p78 = scmp.ne.s32.totalorder %s61, %s77
      %p79 = scmp.eq.s32.totalorder %s27, 0
      %p80 = por %p78, %p79
      %s82 = sadd.s32 %s81, 1
      %p85 = scmp.eq.s32.totalorder %s21, 1
      %p86 = scmp.ne.s32.totalorder %s81, %s83
      %p87 = scmp.eq.s32.totalorder %s21, 0
      %p88 = por %p86, %p87
      %p89 = scmp.ne.s32.totalorder %s81, %s83
      %p90 = scmp.eq.s32.totalorder %s26, 1
      %p91 = por %p89, %p90
      %p92 = scmp.ne.s32.totalorder %s83, %s84
      %p93 = scmp.eq.s32.totalorder %s26, 0
      %p94 = por %p92, %p93
      %p95 = scmp.ne.s32.totalorder %s83, %s84
      %p96 = scmp.eq.s32.totalorder %s27, 1
      %p97 = por %p95, %p96
      %p99 = scmp.ne.s32.totalorder %s84, %s98
      %p100 = scmp.eq.s32.totalorder %s27, 0
      %p101 = por %p99, %p100
      %s103 = sadd.s32 %s102, 1
      %p106 = scmp.eq.s32.totalorder %s21, 1
      %p107 = scmp.ne.s32.totalorder %s102, %s104
      %p108 = scmp.eq.s32.totalorder %s21, 0
      %p109 = por %p107, %p108
      %p110 = scmp.ne.s32.totalorder %s102, %s104
      %p111 = scmp.eq.s32.totalorder %s26, 1
      %p112 = por %p110, %p111
      %p113 = scmp.ne.s32.totalorder %s104, %s105
      %p114 = scmp.eq.s32.totalorder %s26, 0
      %p115 = por %p113, %p114
      %p116 = scmp.ne.s32.totalorder %s104, %s105
      %p117 = scmp.eq.s32.totalorder %s27, 1
      %p118 = por %p116, %p117
      %p120 = scmp.ne.s32.totalorder %s105, %s119
      %p121 = scmp.eq.s32.totalorder %s27, 0
      %p122 = por %p120, %p121
      %s124 = sadd.s32 %s123, 1
      %p127 = scmp.eq.s32.totalorder %s21, 1
      %p128 = scmp.ne.s32.totalorder %s123, %s125
      %p129 = scmp.eq.s32.totalorder %s21, 0
      %p130 = por %p128, %p129
      %p131 = scmp.ne.s32.totalorder %s123, %s125
      %p132 = scmp.eq.s32.totalorder %s26, 1
      %p133 = por %p131, %p132
      %p134 = scmp.ne.s32.totalorder %s125, %s126
      %p135 = scmp.eq.s32.totalorder %s26, 0
      %p136 = por %p134, %p135
      %p137 = scmp.ne.s32.totalorder %s125, %s126
      %p138 = scmp.eq.s32.totalorder %s27, 1
      %p139 = por %p137, %p138
      %p141 = scmp.ne.s32.totalorder %s126, %s140
      %p142 = scmp.eq.s32.totalorder %s27, 0
      %p143 = por %p141, %p142
      %s145 = sadd.s32 %s144, 1
      %p148 = scmp.eq.s32.totalorder %s21, 1
      %p149 = scmp.ne.s32.totalorder %s144, %s146
      %p150 = scmp.eq.s32.totalorder %s21, 0
      %p151 = por %p149, %p150
      %p152 = scmp.ne.s32.totalorder %s144, %s146
      %p153 = scmp.eq.s32.totalorder %s26, 1
      %p154 = por %p152, %p153
      %p155 = scmp.ne.s32.totalorder %s146, %s147
      %p156 = scmp.eq.s32.totalorder %s26, 0
      %p157 = por %p155, %p156
      %p158 = scmp.ne.s32.totalorder %s146, %s147
      %p159 = scmp.eq.s32.totalorder %s27, 1
      %p160 = por %p158, %p159
      %p162 = scmp.ne.s32.totalorder %s147, %s161
      %p163 = scmp.eq.s32.totalorder %s27, 0
      %p164 = por %p162, %p163
      %s166 = sadd.s32 %s165, 1
      %p169 = scmp.eq.s32.totalorder %s21, 1
      %p170 = scmp.ne.s32.totalorder %s165, %s167
      %p171 = scmp.eq.s32.totalorder %s21, 0
      %p172 = por %p170, %p171
      %p173 = scmp.ne.s32.totalorder %s165, %s167
      %p174 = scmp.eq.s32.totalorder %s26, 1
      %p175 = por %p173, %p174
      %p176 = scmp.ne.s32.totalorder %s167, %s168
      %p177 = scmp.eq.s32.totalorder %s26, 0
      %p178 = por %p176, %p177
      %p179 = scmp.ne.s32.totalorder %s167, %s168
      %p180 = scmp.eq.s32.totalorder %s27, 1
      %p181 = por %p179, %p180
      %p183 = scmp.ne.s32.totalorder %s168, %s182
      %p184 = scmp.eq.s32.totalorder %s27, 0
      %p185 = por %p183, %p184
      %s187 = sadd.s32 %s186, 1
      %p190 = scmp.eq.s32.totalorder %s21, 1
      %p191 = scmp.ne.s32.totalorder %s186, %s188
      %p192 = scmp.eq.s32.totalorder %s21, 0
      %p193 = por %p191, %p192
      %p194 = scmp.ne.s32.totalorder %s186, %s188
      %p195 = scmp.eq.s32.totalorder %s26, 1
      %p196 = por %p194, %p195
      %p197 = scmp.ne.s32.totalorder %s188, %s189
      %p198 = scmp.eq.s32.totalorder %s26, 0
      %p199 = por %p197, %p198
      %p200 = scmp.ne.s32.totalorder %s188, %s189
      %p201 = scmp.eq.s32.totalorder %s27, 1
      %p202 = por %p200, %p201
      %p204 = scmp.ne.s32.totalorder %s189, %s203
      %p205 = scmp.eq.s32.totalorder %s27, 0
      %p206 = por %p204, %p205
      %s208 = sadd.s32 %s207, 1
      %p211 = scmp.eq.s32.totalorder %s21, 1
      %p212 = scmp.ne.s32.totalorder %s207, %s209
      %p213 = scmp.eq.s32.totalorder %s21, 0
      %p214 = por %p212, %p213
      %p215 = scmp.ne.s32.totalorder %s207, %s209
      %p216 = scmp.eq.s32.totalorder %s26, 1
      %p217 = por %p215, %p216
      %p218 = scmp.ne.s32.totalorder %s209, %s210
      %p219 = scmp.eq.s32.totalorder %s26, 0
      %p220 = por %p218, %p219
      %p221 = scmp.ne.s32.totalorder %s209, %s210
      %p222 = scmp.eq.s32.totalorder %s27, 1
      %p223 = por %p221, %p222
      %p225 = scmp.ne.s32.totalorder %s210, %s224
      %p226 = scmp.eq.s32.totalorder %s27, 0
      %p227 = por %p225, %p226
      %s228 = ssub.s32 %s21, %s28
      %p229 = scmp.eq.s32.totalorder %s228, 0
      %s231 = sadd.s32 %s230, 1
      %s232 = scalar_select %p229, %s230, %s231
      %p235 = pneg %p229
      %p236 = scmp.eq.s32.totalorder %s21, 1
      %p237 = por %p235, %p236
      %p238 = scmp.ne.s32.totalorder %s230, %s233
      %p239 = scmp.eq.s32.totalorder %s21, 0
      %p240 = por %p238, %p239
      %p241 = scmp.ne.s32.totalorder %s230, %s233
      %p242 = scmp.eq.s32.totalorder %s26, 1
      %p243 = por %p241, %p242
      %p244 = scmp.ne.s32.totalorder %s233, %s234
      %p245 = scmp.eq.s32.totalorder %s26, 0
      %p246 = por %p244, %p245
      %p247 = scmp.ne.s32.totalorder %s233, %s234
      %p248 = scmp.eq.s32.totalorder %s27, 1
      %p249 = por %p247, %p248
      %p251 = scmp.ne.s32.totalorder %s234, %s250
      %p252 = scmp.eq.s32.totalorder %s27, 0
      %p253 = por %p251, %p252
      %s254 = ssub.s32 %s21, %s28
      %p255 = scmp.eq.s32.totalorder %s254, 0
      %s257 = sadd.s32 %s256, 1
      %s258 = scalar_select %p255, %s256, %s257
      %p261 = pneg %p255
      %p262 = scmp.eq.s32.totalorder %s21, 1
      %p263 = por %p261, %p262
      %p264 = scmp.ne.s32.totalorder %s256, %s259
      %p265 = scmp.eq.s32.totalorder %s21, 0
      %p266 = por %p264, %p265
      %p267 = scmp.ne.s32.totalorder %s256, %s259
      %p268 = scmp.eq.s32.totalorder %s26, 1
      %p269 = por %p267, %p268
      %p270 = scmp.ne.s32.totalorder %s259, %s260
      %p271 = scmp.eq.s32.totalorder %s26, 0
      %p272 = por %p270, %p271
      %p273 = scmp.ne.s32.totalorder %s259, %s260
      %p274 = scmp.eq.s32.totalorder %s27, 1
      %p275 = por %p273, %p274
      %p277 = scmp.ne.s32.totalorder %s260, %s276
      %p278 = scmp.eq.s32.totalorder %s27, 0
      %p279 = por %p277, %p278
      %p280 = scmp.le.s32.totalorder 1, %s21
      %p281 = scmp.lt.s32.totalorder %s21, 3
      %p282 = pnand %p280, %p281
      %p283 = pneg %p282
      // Predicated region
      $region9: #{tpu_custom_call.1} parent=5 // pred_check
        _
      $region10: #{tpu_custom_call.1} parent=5 // pred_check_branch
        %285 = sbr.rel (%p282) target = $region12
      $region11: #{tpu_custom_call.1} parent=5 // pred_region
        %s286 = ssub.s32 %s21, 1
        // Predicated region
        $region13: #{tpu_custom_call.1} parent=11 // pred_check
          %p287 = pneg %p94
        $region14: #{tpu_custom_call.1} parent=11 // pred_check_branch
          %289 = sbr.rel (%p287) target = $region16
        $region15: #{tpu_custom_call.1} parent=11 // pred_region
          %s291 = ssub.s32 64, 64
          %292 = vsyncadd [#allocation4], %s291
          %295 = dma.hbm_to_smem %s2, 64, [#allocation2], [#allocation4]
        $region16: #{tpu_custom_call.1} parent=11 // pred_fallthru
          _
        // Predicated region
        $region17: #{tpu_custom_call.1} parent=11 // pred_check
          %p296 = pneg %p115
        $region18: #{tpu_custom_call.1} parent=11 // pred_check_branch
          %298 = sbr.rel (%p296) target = $region20
        $region19: #{tpu_custom_call.1} parent=11 // pred_region
          _
        $region20: #{tpu_custom_call.1} parent=11 // pred_fallthru
          _
        // Predicated region
        $region21: #{tpu_custom_call.1} parent=11 // pred_check
          %p299 = pneg %p136
        $region22: #{tpu_custom_call.1} parent=11 // pred_check_branch
          %301 = sbr.rel (%p299) target = $region24
        $region23: #{tpu_custom_call.1} parent=11 // pred_region
          _
        $region24: #{tpu_custom_call.1} parent=11 // pred_fallthru
          _
        // Predicated region
        $region25: #{tpu_custom_call.1} parent=11 // pred_check
          %p302 = pneg %p157
        $region26: #{tpu_custom_call.1} parent=11 // pred_check_branch
          %304 = sbr.rel (%p302) target = $region28
        $region27: #{tpu_custom_call.1} parent=11 // pred_region
          _
        $region28: #{tpu_custom_call.1} parent=11 // pred_fallthru
          _
        // Predicated region
        $region29: #{tpu_custom_call.1} parent=11 // pred_check
          %p305 = pneg %p178
        $region30: #{tpu_custom_call.1} parent=11 // pred_check_branch
          %307 = sbr.rel (%p305) target = $region32
        $region31: #{tpu_custom_call.1} parent=11 // pred_region
          _
        $region32: #{tpu_custom_call.1} parent=11 // pred_fallthru
          _
        // Predicated region
        $region33: #{tpu_custom_call.1} parent=11 // pred_check
          %p308 = pneg %p199
        $region34: #{tpu_custom_call.1} parent=11 // pred_check_branch
          %310 = sbr.rel (%p308) target = $region36
        $region35: #{tpu_custom_call.1} parent=11 // pred_region
          _
        $region36: #{tpu_custom_call.1} parent=11 // pred_fallthru
          _
        // Predicated region
        $region37: #{tpu_custom_call.1} parent=11 // pred_check
          %p311 = pneg %p220
        $region38: #{tpu_custom_call.1} parent=11 // pred_check_branch
          %313 = sbr.rel (%p311) target = $region40
        $region39: #{tpu_custom_call.1} parent=11 // pred_region
          _
        $region40: #{tpu_custom_call.1} parent=11 // pred_fallthru
          _
      $region12: #{tpu_custom_call.1} parent=5 // pred_fallthru
        _
      %p314 = scmp.lt.s32.totalorder %s21, 2
      // Predicated region
      $region41: #{tpu_custom_call.1} parent=5 // pred_check
        %p315 = pneg %p314
      $region42: #{tpu_custom_call.1} parent=5 // pred_check_branch
        %317 = sbr.rel (%p315) target = $region44
      $region43: #{tpu_custom_call.1} parent=5 // pred_region
        // Predicated region
        $region45: #{tpu_custom_call.1} parent=43 // pred_check
          %p318 = pneg %p41
        $region46: #{tpu_custom_call.1} parent=43 // pred_check_branch
          %320 = sbr.rel (%p318) target = $region48
        $region47: #{tpu_custom_call.1} parent=43 // pred_region
          %s321 = smul.u32 2, %s21
          %p322 = scmp.lt.s32.totalorder %s321, 3
          %s323 = scalar_select %p322, %s321, 3
          %s324 = smul.addr %s323, 3
          %s325 = smul.addr %s324, 8
          %s326 = scalar_lea.vmem %s0, %s325
          %s327 = smul.u32 2, %s21
        $region48: #{tpu_custom_call.1} parent=43 // pred_fallthru
          _
        // Predicated region
        $region49: #{tpu_custom_call.1} parent=43 // pred_check
          %p328 = pneg %p67
        $region50: #{tpu_custom_call.1} parent=43 // pred_check_branch
          %330 = sbr.rel (%p328) target = $region52
        $region51: #{tpu_custom_call.1} parent=43 // pred_region
          %s331 = smul.u32 2, %s21
          %p332 = scmp.lt.s32.totalorder %s331, 3
          %s333 = scalar_select %p332, %s331, 3
          %s334 = smul.addr %s333, 8
          %s335 = scalar_lea.vmem %s1, %s334
          %s336 = smul.u32 2, %s21
        $region52: #{tpu_custom_call.1} parent=43 // pred_fallthru
          _
      $region44: #{tpu_custom_call.1} parent=5 // pred_fallthru
        _
      %p337 = scmp.le.s32.totalorder 1, %s21
      %p338 = scmp.lt.s32.totalorder %s21, 3
      %p339 = pnand %p337, %p338
      %p340 = pneg %p339
      // Predicated region
      $region53: #{tpu_custom_call.1} parent=5 // pred_check
        _
      $region54: #{tpu_custom_call.1} parent=5 // pred_check_branch
        %342 = sbr.rel (%p339) target = $region56
      $region55: #{tpu_custom_call.1} parent=5 // pred_region
        %s343 = ssub.s32 %s21, 1
        // Predicated region
        $region57: #{tpu_custom_call.1} parent=55 // pred_check
          %p344 = pneg %p94
        $region58: #{tpu_custom_call.1} parent=55 // pred_check_branch
          %346 = sbr.rel (%p344) target = $region60
        $region59: #{tpu_custom_call.1} parent=55 // pred_region
          %347 = dma.done [#allocation4], 64
        $region60: #{tpu_custom_call.1} parent=55 // pred_fallthru
          _
        %348 = sfence
        %s349 = smul.u32 2, %s26
        %p350 = scmp.lt.s32.totalorder %s349, 3
        %s351 = scalar_select %p350, %s349, 3
        %s352 = smul.addr %s351, 3
        %s353 = smul.addr %s352, 8
        %s354 = scalar_lea.vmem %s0, %s353
        %p355 = pneg %p47
        %p356 = pneg %p44
        %s357 = smul.u32 2, %s26
        %p358 = scmp.lt.s32.totalorder %s357, 3
        %s359 = scalar_select %p358, %s357, 3
        %s360 = smul.addr %s359, 8
        %s361 = scalar_lea.vmem %s1, %s360
        %p362 = pneg %p73
        %p363 = pneg %p70
        %p364 = pneg %p94
        %p365 = pneg %p91
        %p366 = pneg %p115
        %p367 = pneg %p112
        %p368 = pneg %p136
        %p369 = pneg %p133
        %p370 = pneg %p157
        %p371 = pneg %p154
        %p372 = pneg %p178
        %p373 = pneg %p175
        %p374 = pneg %p199
        %p375 = pneg %p196
        %p376 = pneg %p220
        %p377 = pneg %p217
        %p378 = pneg %p246
        %p379 = pneg %p243
        %s380 = sand.u32 %s233, 1
        %s381 = scalar_lea.sflag [#allocation3], %s380
        %s382 = sand.u32 %s233, 1
        %s383 = smul.addr %s382, 16
        %s384 = scalar_lea.vmem [#allocation5], %s383
        %p385 = pneg %p272
        %p386 = pneg %p269
        %s387 = smul.u32 2, %s26
        %p388 = scmp.lt.s32.totalorder %s387, 3
        %s389 = scalar_select %p388, %s387, 3
        %s390 = smul.addr %s389, 8
        %s391 = scalar_lea.vmem %s10, %s390
        %s392 = smul.u32 2, %s26
        %p393 = scmp.lt.s32.totalorder %s392, 3
        %s394 = scalar_select %p393, %s392, 3
        %s395 = smul.addr %s394, 3
        %s396 = smul.addr %s395, 8
        %s397 = scalar_lea.vmem %s0, %s396
        %s398 = smul.u32 2, %s26
        %s399 = smul.u32 2, %s26
        %p400 = scmp.lt.s32.totalorder %s399, 3
        %s401 = scalar_select %p400, %s399, 3
        %s402 = smul.addr %s401, 8
        %s403 = scalar_lea.vmem %s1, %s402
        %s404 = smul.u32 2, %s26
        %s405 = smul.u32 2, %s26
        %s406 = smul.u32 2, %s26
        %p407 = scmp.lt.s32.totalorder %s406, 3
        %s408 = scalar_select %p407, %s406, 3
        %s409 = smul.addr %s408, 8
        %s410 = scalar_lea.vmem %s10, %s409
        %s411 = smul.u32 2, %s26
        %v412 = vlaneseq
        %v413 = vshrl.u32 %v412, 7
        %v414 = vlaneseq
        %v415 = vand.u32 %v414, 127
        %vm416 = vcmp.eq.s32.totalorder %v413, %v415
        %v417 = vsel %vm416, 1, 0
        %v418 = vcvt.s32.f32 %v417
        %v419 = vld [vmem:[%s397] sm:$0xff]
        %v420 = vld [vmem:[%s397 + $0x18] sm:$0xff]
        %vm421 = vcmask 64512
        %v422 = vsel %vm421, %v419, 0.0
        %423 = vadd.xlane.f32.xlu0 %v422
        %v424 = vpop.xlane.xlu0 %423
        %v425 = vsel %vm421, %v420, 0.0
        %426 = vadd.xlane.f32.xlu0 %v425
        %v427 = vpop.xlane.xlu0 %426
        %v428 = vrcp.pop 8.0
        %v429 = vmul.f32 %v424, %v428
        %v430 = vmul.f32 %v427, %v428
        %v431 = vmul.f32 %v419, %v418
        %v432 = vmul.f32 %v420, %v418
        %v433 = vsel %vm421, %v431, 0.0
        %434 = vadd.xlane.f32.xlu0 %v433
        %v435 = vpop.xlane.xlu0 %434
        %v436 = vsel %vm421, %v432, 0.0
        %437 = vadd.xlane.f32.xlu0 %v436
        %v438 = vpop.xlane.xlu0 %437
        %s439 = sld [smem:[#allocation2]]
        %v440 = vstv %s439
        %v441 = vmul.f32 %v419, %v440
        %v442 = vmul.f32 %v420, %v440
        %s443 = sld [smem:[#allocation2 + $0x1]]
        %v444 = vstv %s443
        %v445 = vmul.f32 %v419, %v444
        %v446 = vmul.f32 %v420, %v444
        %s447 = sld [smem:[#allocation2 + $0x2]]
        %v448 = vstv %s447
        %v449 = vmul.f32 %v419, %v448
        %v450 = vmul.f32 %v420, %v448
        %s451 = sld [smem:[#allocation2 + $0x3]]
        %v452 = vstv %s451
        %v453 = vmul.f32 %v419, %v452
        %v454 = vmul.f32 %v420, %v452
        %s455 = scalar_lea.vmem %s397, 8
        %v456 = vld [vmem:[%s455] sm:$0xff]
        %v457 = vld [vmem:[%s455 + $0x18] sm:$0xff]
        %v458 = vsel %vm421, %v456, 0.0
        %459 = vadd.xlane.f32.xlu0 %v458
        %v460 = vpop.xlane.xlu0 %459
        %v461 = vsel %vm421, %v457, 0.0
        %462 = vadd.xlane.f32.xlu0 %v461
        %v463 = vpop.xlane.xlu0 %462
        %v464 = vmul.f32 %v460, %v428
        %v465 = vmul.f32 %v463, %v428
        %v466 = vmul.f32 %v456, %v418
        %v467 = vmul.f32 %v457, %v418
        %v468 = vsel %vm421, %v466, 0.0
        %469 = vadd.xlane.f32.xlu0 %v468
        %v470 = vpop.xlane.xlu0 %469
        %v471 = vsel %vm421, %v467, 0.0
        %472 = vadd.xlane.f32.xlu0 %v471
        %v473 = vpop.xlane.xlu0 %472
        %s474 = sld [smem:[#allocation2 + $0x80]]
        %v475 = vstv %s474
        %v476 = vmul.f32 %v456, %v475
        %v477 = vmul.f32 %v457, %v475
        %v478 = vadd.f32 %v441, %v476
        %v479 = vadd.f32 %v442, %v477
        %s480 = sld [smem:[#allocation2 + $0x81]]
        %v481 = vstv %s480
        %v482 = vmul.f32 %v456, %v481
        %v483 = vmul.f32 %v457, %v481
        %v484 = vadd.f32 %v445, %v482
        %v485 = vadd.f32 %v446, %v483
        %s486 = sld [smem:[#allocation2 + $0x82]]
        %v487 = vstv %s486
        %v488 = vmul.f32 %v456, %v487
        %v489 = vmul.f32 %v457, %v487
        %v490 = vadd.f32 %v449, %v488
        %v491 = vadd.f32 %v450, %v489
        %s492 = sld [smem:[#allocation2 + $0x83]]
        %v493 = vstv %s492
        %v494 = vmul.f32 %v456, %v493
        %v495 = vmul.f32 %v457, %v493
        %v496 = vadd.f32 %v453, %v494
        %v497 = vadd.f32 %v454, %v495
        %s498 = scalar_lea.vmem %s397, 16
        %v499 = vld [vmem:[%s498] sm:$0xff]
        %v500 = vld [vmem:[%s498 + $0x18] sm:$0xff]
        %v501 = vsel %vm421, %v499, 0.0
        %502 = vadd.xlane.f32.xlu0 %v501
        %v503 = vpop.xlane.xlu0 %502
        %v504 = vsel %vm421, %v500, 0.0
        %505 = vadd.xlane.f32.xlu0 %v504
        %v506 = vpop.xlane.xlu0 %505
        %v507 = vmul.f32 %v503, %v428
        %v508 = vmul.f32 %v506, %v428
        %v509 = vmul.f32 %v499, %v418
        %v510 = vmul.f32 %v500, %v418
        %v511 = vsel %vm421, %v509, 0.0
        %512 = vadd.xlane.f32.xlu0 %v511
        %v513 = vpop.xlane.xlu0 %512
        %v514 = vsel %vm421, %v510, 0.0
        %515 = vadd.xlane.f32.xlu0 %v514
        %v516 = vpop.xlane.xlu0 %515
        %s517 = sld [smem:[#allocation2 + $0x100]]
        %v518 = vstv %s517
        %v519 = vmul.f32 %v499, %v518
        %v520 = vmul.f32 %v500, %v518
        %v521 = vadd.f32 %v478, %v519
        %v522 = vadd.f32 %v479, %v520
        %s523 = sld [smem:[#allocation2 + $0x101]]
        %v524 = vstv %s523
        %v525 = vmul.f32 %v499, %v524
        %v526 = vmul.f32 %v500, %v524
        %v527 = vadd.f32 %v484, %v525
        %v528 = vadd.f32 %v485, %v526
        %s529 = sld [smem:[#allocation2 + $0x102]]
        %v530 = vstv %s529
        %v531 = vmul.f32 %v499, %v530
        %v532 = vmul.f32 %v500, %v530
        %v533 = vadd.f32 %v490, %v531
        %v534 = vadd.f32 %v491, %v532
        %s535 = sld [smem:[#allocation2 + $0x103]]
        %v536 = vstv %s535
        %v537 = vmul.f32 %v499, %v536
        %v538 = vmul.f32 %v500, %v536
        %v539 = vadd.f32 %v496, %v537
        %v540 = vadd.f32 %v497, %v538
        %vm541 = vcmask 7168
        %v542 = vsel %vm541, %v429, %v464
        %v543 = vsel %vm541, %v430, %v465
        %vm544 = vcmask 15360
        %v545 = vsel %vm544, %v542, %v507
        %v546 = vsel %vm544, %v543, %v508
        %v547 = vsel %vm541, %v435, %v470
        %v548 = vsel %vm541, %v438, %v473
        %v549 = vsel %vm544, %v547, %v513
        %v550 = vsel %vm544, %v548, %v516
        %v551 = vld [vmem:[%s403] sm:$0xff]
        %v552 = vld [vmem:[%s403 + $0x8] sm:$0xff]
        %555 = vrot.lane.b32.xlu0 %v545, 5
        %v556 = vpop.permute.xlu0 %555
        %557 = vrot.lane.b32.xlu0 %v546, 5
        %v558 = vpop.permute.xlu0 %557
        %563 = vrot.lane.b32.xlu0 %v549, 8
        %v564 = vpop.permute.xlu0 %563
        %565 = vrot.lane.b32.xlu0 %v550, 8
        %v566 = vpop.permute.xlu0 %565
        %vm569 = vcmask 39936
        %v570 = vsel %vm569, %v551, %v556
        %v571 = vsel %vm569, %v552, %v558
        %v572 = vsel %vm421, %v570, %v564
        %v573 = vsel %vm421, %v571, %v566
        %vm574 = vcmask 89088
        %v575 = vsel %vm574, %v572, 0.0
        %v576 = vrot.slane %v575, 4
        %v577 = vadd.f32 %v575, %v576
        %v578 = vrot.slane %v577, 2
        %v579 = vadd.f32 %v577, %v578
        %v580 = vrot.slane %v579, 1
        %v581 = vadd.f32 %v579, %v580
        %v582 = vsel %vm574, %v573, 0.0
        %v583 = vrot.slane %v582, 4
        %v584 = vadd.f32 %v582, %v583
        %v585 = vrot.slane %v584, 2
        %v586 = vadd.f32 %v584, %v585
        %v587 = vrot.slane %v586, 1
        %v588 = vadd.f32 %v586, %v587
        %v589 = vmul.f32 %v581, %v428
        %v590 = vmul.f32 %v588, %v428
        %vm593 = vcmask 1041409
        %v594 = vsel %vm593, %v590, %v589
        %v596 = vsel %vm574, %v594, 1.0
        %v597 = vld [vmem:[%s3] sm:$0xff]
        %v598 = vld [vmem:[%s3 + $0x8] sm:$0x7]
        %v600 = vsel %vm574, %v572, 0
        %v603 = vsel %vm574, %v573, 0
        %vm605 = vcmask 1042432
        %v607 = vsel %vm605, %v598, 0
        %609 = vmatprep.subr.mxu0 0.0
        %610 = vmatpush1.msra.mxu0 %v597
        %611 = vmatprep.subr.mxu0 0.0
        %612 = vmatpush1.msra.mxu0 %v607
        %613 = vmatprep.subr.mxu0 0.0
        %614 = vmatpush1.msra.mxu0 0.0
        %615 = vmatprep.subr.mxu0 0.0
        %616 = vmatpush1.msra.mxu0 0.0
        %617 = vmatprep.subr.mxu0 0.0
        %618 = vmatpush1.msra.mxu0 0.0
        %619 = vmatprep.subr.mxu0 0.0
        %620 = vmatpush1.msra.mxu0 0.0
        %621 = vmatprep.subr.mxu0 0.0
        %622 = vmatpush1.msra.mxu0 0.0
        %623 = vmatprep.subr.mxu0 0.0
        %624 = vmatpush1.msra.mxu0 0.0
        %625 = vmatprep.subr.mxu0 0.0
        %626 = vmatpush1.msra.mxu0 0.0
        %627 = vmatprep.subr.mxu0 0.0
        %628 = vmatpush1.msra.mxu0 0.0
        %629 = vmatprep.subr.mxu0 0.0
        %630 = vmatpush1.msra.mxu0 0.0
        %631 = vmatprep.subr.mxu0 0.0
        %632 = vmatpush1.msra.mxu0 0.0
        %633 = vmatprep.subr.mxu0 0.0
        %634 = vmatpush1.msra.mxu0 0.0
        %635 = vmatprep.subr.mxu0 0.0
        %636 = vmatpush1.msra.mxu0 0.0
        %637 = vmatprep.subr.mxu0 0.0
        %638 = vmatpush1.msra.mxu0 0.0
        %639 = vmatprep.subr.mxu0 0.0
        %640 = vmatpush1.msra.mxu0 0.0
        %641 = vmatprep.subr.mxu0 0.0
        %642 = vmatpush1.msra.mxu0 0.0
        %643 = vmatprep.subr.mxu0 0.0
        %644 = vmatpush1.msra.mxu0 0.0
        %645 = vmatprep.subr.mxu0 0.0
        %646 = vmatpush1.msra.mxu0 0.0
        %647 = vmatprep.subr.mxu0 0.0
        %648 = vmatpush1.msra.mxu0 0.0
        %649 = vmatprep.subr.mxu0 0.0
        %650 = vmatpush1.msra.mxu0 0.0
        %651 = vmatprep.subr.mxu0 0.0
        %652 = vmatpush1.msra.mxu0 0.0
        %653 = vmatprep.subr.mxu0 0.0
        %654 = vmatpush1.msra.mxu0 0.0
        %655 = vmatprep.subr.mxu0 0.0
        %656 = vmatpush1.msra.mxu0 0.0
        %657 = vmatprep.subr.mxu0 0.0
        %658 = vmatpush1.msra.mxu0 0.0
        %659 = vmatprep.subr.mxu0 0.0
        %660 = vmatpush1.msra.mxu0 0.0
        %661 = vmatprep.subr.mxu0 0.0
        %662 = vmatpush1.msra.mxu0 0.0
        %663 = vmatprep.subr.mxu0 0.0
        %664 = vmatpush1.msra.mxu0 0.0
        %665 = vmatprep.subr.mxu0 0.0
        %666 = vmatpush1.msra.mxu0 0.0
        %667 = vmatprep.subr.mxu0 0.0
        %668 = vmatpush1.msra.mxu0 0.0
        %669 = vmatprep.subr.mxu0 0.0
        %670 = vmatpush1.msra.mxu0 0.0
        %671 = vmatprep.subr.mxu0 0.0
        %672 = vmatpush1.msra.mxu0 0.0
        %673 = vmatprep.mubr.f32.mxu0 0.0
        %674 = vmatmul.mubr.f32.gmra.mrb[0].mxu0 %v600
        %v675 = vpop.f32.mrb[0].mxu0
        %v676 = vadd.f32 0.0, %v675
        %v677 = vpop.f32.mrb[0].mxu0
        %678 = vmatprep.mubr.f32.mxu0 0.0
        %679 = vmatmul.mubr.f32.gmra.mrb[0].mxu0 %v603
        %v680 = vpop.f32.mrb[0].mxu0
        %v681 = vadd.f32 0.0, %v680
        %v682 = vpop.f32.mrb[0].mxu0
        %683 = vdwg.mxu0
        %v684 = vld [vmem:[%s4] sm:$0xff]
        %v685 = vld [vmem:[%s4 + $0x8] sm:$0x7]
        %v687 = vsel %vm605, %v685, 0
        %689 = vmatprep.subr.mxu0 0.0
        %690 = vmatpush1.msra.mxu0 %v684
        %691 = vmatprep.subr.mxu0 0.0
        %692 = vmatpush1.msra.mxu0 %v687
        %693 = vmatprep.subr.mxu0 0.0
        %694 = vmatpush1.msra.mxu0 0.0
        %695 = vmatprep.subr.mxu0 0.0
        %696 = vmatpush1.msra.mxu0 0.0
        %697 = vmatprep.subr.mxu0 0.0
        %698 = vmatpush1.msra.mxu0 0.0
        %699 = vmatprep.subr.mxu0 0.0
        %700 = vmatpush1.msra.mxu0 0.0
        %701 = vmatprep.subr.mxu0 0.0
        %702 = vmatpush1.msra.mxu0 0.0
        %703 = vmatprep.subr.mxu0 0.0
        %704 = vmatpush1.msra.mxu0 0.0
        %705 = vmatprep.subr.mxu0 0.0
        %706 = vmatpush1.msra.mxu0 0.0
        %707 = vmatprep.subr.mxu0 0.0
        %708 = vmatpush1.msra.mxu0 0.0
        %709 = vmatprep.subr.mxu0 0.0
        %710 = vmatpush1.msra.mxu0 0.0
        %711 = vmatprep.subr.mxu0 0.0
        %712 = vmatpush1.msra.mxu0 0.0
        %713 = vmatprep.subr.mxu0 0.0
        %714 = vmatpush1.msra.mxu0 0.0
        %715 = vmatprep.subr.mxu0 0.0
        %716 = vmatpush1.msra.mxu0 0.0
        %717 = vmatprep.subr.mxu0 0.0
        %718 = vmatpush1.msra.mxu0 0.0
        %719 = vmatprep.subr.mxu0 0.0
        %720 = vmatpush1.msra.mxu0 0.0
        %721 = vmatprep.subr.mxu0 0.0
        %722 = vmatpush1.msra.mxu0 0.0
        %723 = vmatprep.subr.mxu0 0.0
        %724 = vmatpush1.msra.mxu0 0.0
        %725 = vmatprep.subr.mxu0 0.0
        %726 = vmatpush1.msra.mxu0 0.0
        %727 = vmatprep.subr.mxu0 0.0
        %728 = vmatpush1.msra.mxu0 0.0
        %729 = vmatprep.subr.mxu0 0.0
        %730 = vmatpush1.msra.mxu0 0.0
        %731 = vmatprep.subr.mxu0 0.0
        %732 = vmatpush1.msra.mxu0 0.0
        %733 = vmatprep.subr.mxu0 0.0
        %734 = vmatpush1.msra.mxu0 0.0
        %735 = vmatprep.subr.mxu0 0.0
        %736 = vmatpush1.msra.mxu0 0.0
        %737 = vmatprep.subr.mxu0 0.0
        %738 = vmatpush1.msra.mxu0 0.0
        %739 = vmatprep.subr.mxu0 0.0
        %740 = vmatpush1.msra.mxu0 0.0
        %741 = vmatprep.subr.mxu0 0.0
        %742 = vmatpush1.msra.mxu0 0.0
        %743 = vmatprep.subr.mxu0 0.0
        %744 = vmatpush1.msra.mxu0 0.0
        %745 = vmatprep.subr.mxu0 0.0
        %746 = vmatpush1.msra.mxu0 0.0
        %747 = vmatprep.subr.mxu0 0.0
        %748 = vmatpush1.msra.mxu0 0.0
        %749 = vmatprep.subr.mxu0 0.0
        %750 = vmatpush1.msra.mxu0 0.0
        %751 = vmatprep.subr.mxu0 0.0
        %752 = vmatpush1.msra.mxu0 0.0
        %753 = vmatprep.mubr.f32.mxu0 0.0
        %754 = vmatmul.mubr.f32.gmra.mrb[0].mxu0 %v600
        %v755 = vpop.f32.mrb[0].mxu0
        %v756 = vadd.f32 0.0, %v755
        %v757 = vpop.f32.mrb[0].mxu0
        %758 = vmatprep.mubr.f32.mxu0 0.0
        %759 = vmatmul.mubr.f32.gmra.mrb[0].mxu0 %v603
        %v760 = vpop.f32.mrb[0].mxu0
        %v761 = vadd.f32 0.0, %v760
        %v762 = vpop.f32.mrb[0].mxu0
        %763 = vdwg.mxu0
        %v764 = vld [vmem:[%s5] sm:$0xff]
        %v765 = vld [vmem:[%s5 + $0x8] sm:$0x7]
        %v767 = vsel %vm605, %v765, 0
        %769 = vmatprep.subr.mxu0 0.0
        %770 = vmatpush1.msra.mxu0 %v764
        %771 = vmatprep.subr.mxu0 0.0
        %772 = vmatpush1.msra.mxu0 %v767
        %773 = vmatprep.subr.mxu0 0.0
        %774 = vmatpush1.msra.mxu0 0.0
        %775 = vmatprep.subr.mxu0 0.0
        %776 = vmatpush1.msra.mxu0 0.0
        %777 = vmatprep.subr.mxu0 0.0
        %778 = vmatpush1.msra.mxu0 0.0
        %779 = vmatprep.subr.mxu0 0.0
        %780 = vmatpush1.msra.mxu0 0.0
        %781 = vmatprep.subr.mxu0 0.0
        %782 = vmatpush1.msra.mxu0 0.0
        %783 = vmatprep.subr.mxu0 0.0
        %784 = vmatpush1.msra.mxu0 0.0
        %785 = vmatprep.subr.mxu0 0.0
        %786 = vmatpush1.msra.mxu0 0.0
        %787 = vmatprep.subr.mxu0 0.0
        %788 = vmatpush1.msra.mxu0 0.0
        %789 = vmatprep.subr.mxu0 0.0
        %790 = vmatpush1.msra.mxu0 0.0
        %791 = vmatprep.subr.mxu0 0.0
        %792 = vmatpush1.msra.mxu0 0.0
        %793 = vmatprep.subr.mxu0 0.0
        %794 = vmatpush1.msra.mxu0 0.0
        %795 = vmatprep.subr.mxu0 0.0
        %796 = vmatpush1.msra.mxu0 0.0
        %797 = vmatprep.subr.mxu0 0.0
        %798 = vmatpush1.msra.mxu0 0.0
        %799 = vmatprep.subr.mxu0 0.0
        %800 = vmatpush1.msra.mxu0 0.0
        %801 = vmatprep.subr.mxu0 0.0
        %802 = vmatpush1.msra.mxu0 0.0
        %803 = vmatprep.subr.mxu0 0.0
        %804 = vmatpush1.msra.mxu0 0.0
        %805 = vmatprep.subr.mxu0 0.0
        %806 = vmatpush1.msra.mxu0 0.0
        %807 = vmatprep.subr.mxu0 0.0
        %808 = vmatpush1.msra.mxu0 0.0
        %809 = vmatprep.subr.mxu0 0.0
        %810 = vmatpush1.msra.mxu0 0.0
        %811 = vmatprep.subr.mxu0 0.0
        %812 = vmatpush1.msra.mxu0 0.0
        %813 = vmatprep.subr.mxu0 0.0
        %814 = vmatpush1.msra.mxu0 0.0
        %815 = vmatprep.subr.mxu0 0.0
        %816 = vmatpush1.msra.mxu0 0.0
        %817 = vmatprep.subr.mxu0 0.0
        %818 = vmatpush1.msra.mxu0 0.0
        %819 = vmatprep.subr.mxu0 0.0
        %820 = vmatpush1.msra.mxu0 0.0
        %821 = vmatprep.subr.mxu0 0.0
        %822 = vmatpush1.msra.mxu0 0.0
        %823 = vmatprep.subr.mxu0 0.0
        %824 = vmatpush1.msra.mxu0 0.0
        %825 = vmatprep.subr.mxu0 0.0
        %826 = vmatpush1.msra.mxu0 0.0
        %827 = vmatprep.subr.mxu0 0.0
        %828 = vmatpush1.msra.mxu0 0.0
        %829 = vmatprep.subr.mxu0 0.0
        %830 = vmatpush1.msra.mxu0 0.0
        %831 = vmatprep.subr.mxu0 0.0
        %832 = vmatpush1.msra.mxu0 0.0
        %833 = vmatprep.mubr.f32.mxu0 0.0
        %834 = vmatmul.mubr.f32.gmra.mrb[0].mxu0 %v600
        %v835 = vpop.f32.mrb[0].mxu0
        %v836 = vadd.f32 0.0, %v835
        %v837 = vpop.f32.mrb[0].mxu0
        %838 = vmatprep.mubr.f32.mxu0 0.0
        %839 = vmatmul.mubr.f32.gmra.mrb[0].mxu0 %v603
        %v840 = vpop.f32.mrb[0].mxu0
        %v841 = vadd.f32 0.0, %v840
        %v842 = vpop.f32.mrb[0].mxu0
        %843 = vdwg.mxu0
        %v844 = vld [vmem:[%s6] sm:$0xff]
        %v845 = vld [vmem:[%s6 + $0x8] sm:$0xf]
        %vm846 = vcmask 97280
        %v848 = vsel %vm846, %v596, 0
        %vm850 = vcmask 1043456
        %v852 = vsel %vm850, %v845, 0
        %854 = vmatprep.subr.mxu0 0.0
        %855 = vmatpush1.msra.mxu0 %v844
        %856 = vmatprep.subr.mxu0 0.0
        %857 = vmatpush1.msra.mxu0 %v852
        %858 = vmatprep.subr.mxu0 0.0
        %859 = vmatpush1.msra.mxu0 0.0
        %860 = vmatprep.subr.mxu0 0.0
        %861 = vmatpush1.msra.mxu0 0.0
        %862 = vmatprep.subr.mxu0 0.0
        %863 = vmatpush1.msra.mxu0 0.0
        %864 = vmatprep.subr.mxu0 0.0
        %865 = vmatpush1.msra.mxu0 0.0
        %866 = vmatprep.subr.mxu0 0.0
        %867 = vmatpush1.msra.mxu0 0.0
        %868 = vmatprep.subr.mxu0 0.0
        %869 = vmatpush1.msra.mxu0 0.0
        %870 = vmatprep.subr.mxu0 0.0
        %871 = vmatpush1.msra.mxu0 0.0
        %872 = vmatprep.subr.mxu0 0.0
        %873 = vmatpush1.msra.mxu0 0.0
        %874 = vmatprep.subr.mxu0 0.0
        %875 = vmatpush1.msra.mxu0 0.0
        %876 = vmatprep.subr.mxu0 0.0
        %877 = vmatpush1.msra.mxu0 0.0
        %878 = vmatprep.subr.mxu0 0.0
        %879 = vmatpush1.msra.mxu0 0.0
        %880 = vmatprep.subr.mxu0 0.0
        %881 = vmatpush1.msra.mxu0 0.0
        %882 = vmatprep.subr.mxu0 0.0
        %883 = vmatpush1.msra.mxu0 0.0
        %884 = vmatprep.subr.mxu0 0.0
        %885 = vmatpush1.msra.mxu0 0.0
        %886 = vmatprep.subr.mxu0 0.0
        %887 = vmatpush1.msra.mxu0 0.0
        %888 = vmatprep.subr.mxu0 0.0
        %889 = vmatpush1.msra.mxu0 0.0
        %890 = vmatprep.subr.mxu0 0.0
        %891 = vmatpush1.msra.mxu0 0.0
        %892 = vmatprep.subr.mxu0 0.0
        %893 = vmatpush1.msra.mxu0 0.0
        %894 = vmatprep.subr.mxu0 0.0
        %895 = vmatpush1.msra.mxu0 0.0
        %896 = vmatprep.subr.mxu0 0.0
        %897 = vmatpush1.msra.mxu0 0.0
        %898 = vmatprep.subr.mxu0 0.0
        %899 = vmatpush1.msra.mxu0 0.0
        %900 = vmatprep.subr.mxu0 0.0
        %901 = vmatpush1.msra.mxu0 0.0
        %902 = vmatprep.subr.mxu0 0.0
        %903 = vmatpush1.msra.mxu0 0.0
        %904 = vmatprep.subr.mxu0 0.0
        %905 = vmatpush1.msra.mxu0 0.0
        %906 = vmatprep.subr.mxu0 0.0
        %907 = vmatpush1.msra.mxu0 0.0
        %908 = vmatprep.subr.mxu0 0.0
        %909 = vmatpush1.msra.mxu0 0.0
        %910 = vmatprep.subr.mxu0 0.0
        %911 = vmatpush1.msra.mxu0 0.0
        %912 = vmatprep.subr.mxu0 0.0
        %913 = vmatpush1.msra.mxu0 0.0
        %914 = vmatprep.subr.mxu0 0.0
        %915 = vmatpush1.msra.mxu0 0.0
        %916 = vmatprep.subr.mxu0 0.0
        %917 = vmatpush1.msra.mxu0 0.0
        %918 = vmatprep.mubr.f32.mxu0 0.0
        %919 = vmatmul.mubr.f32.gmra.mrb[0].mxu0 %v848
        %v920 = vpop.f32.mrb[0].mxu0
        %v921 = vadd.f32 0.0, %v920
        %v922 = vpop.f32.mrb[0].mxu0
        %923 = vdwg.mxu0
        %v924 = vld [vmem:[%s7] sm:$0xff]
        %v925 = vld [vmem:[%s7 + $0x8] sm:$0xf]
        %v927 = vsel %vm850, %v925, 0
        %929 = vmatprep.subr.mxu0 0.0
        %930 = vmatpush1.msra.mxu0 %v924
        %931 = vmatprep.subr.mxu0 0.0
        %932 = vmatpush1.msra.mxu0 %v927
        %933 = vmatprep.subr.mxu0 0.0
        %934 = vmatpush1.msra.mxu0 0.0
        %935 = vmatprep.subr.mxu0 0.0
        %936 = vmatpush1.msra.mxu0 0.0
        %937 = vmatprep.subr.mxu0 0.0
        %938 = vmatpush1.msra.mxu0 0.0
        %939 = vmatprep.subr.mxu0 0.0
        %940 = vmatpush1.msra.mxu0 0.0
        %941 = vmatprep.subr.mxu0 0.0
        %942 = vmatpush1.msra.mxu0 0.0
        %943 = vmatprep.subr.mxu0 0.0
        %944 = vmatpush1.msra.mxu0 0.0
        %945 = vmatprep.subr.mxu0 0.0
        %946 = vmatpush1.msra.mxu0 0.0
        %947 = vmatprep.subr.mxu0 0.0
        %948 = vmatpush1.msra.mxu0 0.0
        %949 = vmatprep.subr.mxu0 0.0
        %950 = vmatpush1.msra.mxu0 0.0
        %951 = vmatprep.subr.mxu0 0.0
        %952 = vmatpush1.msra.mxu0 0.0
        %953 = vmatprep.subr.mxu0 0.0
        %954 = vmatpush1.msra.mxu0 0.0
        %955 = vmatprep.subr.mxu0 0.0
        %956 = vmatpush1.msra.mxu0 0.0
        %957 = vmatprep.subr.mxu0 0.0
        %958 = vmatpush1.msra.mxu0 0.0
        %959 = vmatprep.subr.mxu0 0.0
        %960 = vmatpush1.msra.mxu0 0.0
        %961 = vmatprep.subr.mxu0 0.0
        %962 = vmatpush1.msra.mxu0 0.0
        %963 = vmatprep.subr.mxu0 0.0
        %964 = vmatpush1.msra.mxu0 0.0
        %965 = vmatprep.subr.mxu0 0.0
        %966 = vmatpush1.msra.mxu0 0.0
        %967 = vmatprep.subr.mxu0 0.0
        %968 = vmatpush1.msra.mxu0 0.0
        %969 = vmatprep.subr.mxu0 0.0
        %970 = vmatpush1.msra.mxu0 0.0
        %971 = vmatprep.subr.mxu0 0.0
        %972 = vmatpush1.msra.mxu0 0.0
        %973 = vmatprep.subr.mxu0 0.0
        %974 = vmatpush1.msra.mxu0 0.0
        %975 = vmatprep.subr.mxu0 0.0
        %976 = vmatpush1.msra.mxu0 0.0
        %977 = vmatprep.subr.mxu0 0.0
        %978 = vmatpush1.msra.mxu0 0.0
        %979 = vmatprep.subr.mxu0 0.0
        %980 = vmatpush1.msra.mxu0 0.0
        %981 = vmatprep.subr.mxu0 0.0
        %982 = vmatpush1.msra.mxu0 0.0
        %983 = vmatprep.subr.mxu0 0.0
        %984 = vmatpush1.msra.mxu0 0.0
        %985 = vmatprep.subr.mxu0 0.0
        %986 = vmatpush1.msra.mxu0 0.0
        %987 = vmatprep.subr.mxu0 0.0
        %988 = vmatpush1.msra.mxu0 0.0
        %989 = vmatprep.subr.mxu0 0.0
        %990 = vmatpush1.msra.mxu0 0.0
        %991 = vmatprep.subr.mxu0 0.0
        %992 = vmatpush1.msra.mxu0 0.0
        %993 = vmatprep.mubr.f32.mxu0 0.0
        %994 = vmatmul.mubr.f32.gmra.mrb[0].mxu0 %v848
        %v995 = vpop.f32.mrb[0].mxu0
        %v996 = vadd.f32 0.0, %v995
        %v997 = vpop.f32.mrb[0].mxu0
        %998 = vdwg.mxu0
        %v999 = vld [vmem:[%s8] sm:$0xff]
        %v1000 = vld [vmem:[%s8 + $0x8] sm:$0xf]
        %v1002 = vsel %vm850, %v1000, 0
        %1004 = vmatprep.subr.mxu0 0.0
        %1005 = vmatpush1.msra.mxu0 %v999
        %1006 = vmatprep.subr.mxu0 0.0
        %1007 = vmatpush1.msra.mxu0 %v1002
        %1008 = vmatprep.subr.mxu0 0.0
        %1009 = vmatpush1.msra.mxu0 0.0
        %1010 = vmatprep.subr.mxu0 0.0
        %1011 = vmatpush1.msra.mxu0 0.0
        %1012 = vmatprep.subr.mxu0 0.0
        %1013 = vmatpush1.msra.mxu0 0.0
        %1014 = vmatprep.subr.mxu0 0.0
        %1015 = vmatpush1.msra.mxu0 0.0
        %1016 = vmatprep.subr.mxu0 0.0
        %1017 = vmatpush1.msra.mxu0 0.0
        %1018 = vmatprep.subr.mxu0 0.0
        %1019 = vmatpush1.msra.mxu0 0.0
        %1020 = vmatprep.subr.mxu0 0.0
        %1021 = vmatpush1.msra.mxu0 0.0
        %1022 = vmatprep.subr.mxu0 0.0
        %1023 = vmatpush1.msra.mxu0 0.0
        %1024 = vmatprep.subr.mxu0 0.0
        %1025 = vmatpush1.msra.mxu0 0.0
        %1026 = vmatprep.subr.mxu0 0.0
        %1027 = vmatpush1.msra.mxu0 0.0
        %1028 = vmatprep.subr.mxu0 0.0
        %1029 = vmatpush1.msra.mxu0 0.0
        %1030 = vmatprep.subr.mxu0 0.0
        %1031 = vmatpush1.msra.mxu0 0.0
        %1032 = vmatprep.subr.mxu0 0.0
        %1033 = vmatpush1.msra.mxu0 0.0
        %1034 = vmatprep.subr.mxu0 0.0
        %1035 = vmatpush1.msra.mxu0 0.0
        %1036 = vmatprep.subr.mxu0 0.0
        %1037 = vmatpush1.msra.mxu0 0.0
        %1038 = vmatprep.subr.mxu0 0.0
        %1039 = vmatpush1.msra.mxu0 0.0
        %1040 = vmatprep.subr.mxu0 0.0
        %1041 = vmatpush1.msra.mxu0 0.0
        %1042 = vmatprep.subr.mxu0 0.0
        %1043 = vmatpush1.msra.mxu0 0.0
        %1044 = vmatprep.subr.mxu0 0.0
        %1045 = vmatpush1.msra.mxu0 0.0
        %1046 = vmatprep.subr.mxu0 0.0
        %1047 = vmatpush1.msra.mxu0 0.0
        %1048 = vmatprep.subr.mxu0 0.0
        %1049 = vmatpush1.msra.mxu0 0.0
        %1050 = vmatprep.subr.mxu0 0.0
        %1051 = vmatpush1.msra.mxu0 0.0
        %1052 = vmatprep.subr.mxu0 0.0
        %1053 = vmatpush1.msra.mxu0 0.0
        %1054 = vmatprep.subr.mxu0 0.0
        %1055 = vmatpush1.msra.mxu0 0.0
        %1056 = vmatprep.subr.mxu0 0.0
        %1057 = vmatpush1.msra.mxu0 0.0
        %1058 = vmatprep.subr.mxu0 0.0
        %1059 = vmatpush1.msra.mxu0 0.0
        %1060 = vmatprep.subr.mxu0 0.0
        %1061 = vmatpush1.msra.mxu0 0.0
        %1062 = vmatprep.subr.mxu0 0.0
        %1063 = vmatpush1.msra.mxu0 0.0
        %1064 = vmatprep.subr.mxu0 0.0
        %1065 = vmatpush1.msra.mxu0 0.0
        %1066 = vmatprep.subr.mxu0 0.0
        %1067 = vmatpush1.msra.mxu0 0.0
        %1068 = vmatprep.mubr.f32.mxu0 0.0
        %1069 = vmatmul.mubr.f32.gmra.mrb[0].mxu0 %v848
        %v1070 = vpop.f32.mrb[0].mxu0
        %v1071 = vadd.f32 0.0, %v1070
        %v1072 = vpop.f32.mrb[0].mxu0
        %1073 = vdwg.mxu0
        %v1076 = vunpack.c.l.s4 1966171168
        %v1077 = vunpack.c.0.s8 %v1076
        %v1078 = vlaneseq
        %v1079 = vshrl.u32 %v1078, 7
        %v1080 = vsub.s32 %v1077, %v1079
        %v1081 = vrot.slane %v996, %v1080
        %v1082 = vcombine.high %v1081, %v1081
        %v1084 = vunpack.c.l.s4 1966171168
        %v1085 = vunpack.c.0.s8 %v1084
        %v1086 = vlaneseq
        %v1087 = vshrl.u32 %v1086, 7
        %v1088 = vsub.s32 %v1085, %v1087
        %v1089 = vrot.slane %v1081, %v1088
        %v1091 = vunpack.c.l.s4 1966171168
        %v1092 = vunpack.c.0.s8 %v1091
        %v1093 = vlaneseq
        %v1094 = vshrl.u32 %v1093, 7
        %v1095 = vsub.s32 %v1092, %v1094
        %v1096 = vrot.slane %v1082, %v1095
        %v1097 = vlaneseq
        %v1098 = vshrl.u32 %v1097, 7
        %v1099 = vsub.s32 0, %v1098
        %v1100 = vrot.slane %v1089, %v1099
        %v1101 = vlaneseq
        %v1102 = vshrl.u32 %v1101, 7
        %v1103 = vsub.s32 0, %v1102
        %v1104 = vrot.slane %v1096, %v1103
        %v1107 = vadd.f32 %v756, %v1100
        %v1108 = vadd.f32 %v761, %v1104
        %v1111 = vunpack.c.l.s4 1966171168
        %v1112 = vunpack.c.0.s8 %v1111
        %v1113 = vlaneseq
        %v1114 = vshrl.u32 %v1113, 7
        %v1115 = vsub.s32 %v1112, %v1114
        %v1116 = vrot.slane %v1071, %v1115
        %v1117 = vcombine.high %v1116, %v1116
        %v1119 = vunpack.c.l.s4 1966171168
        %v1120 = vunpack.c.0.s8 %v1119
        %v1121 = vlaneseq
        %v1122 = vshrl.u32 %v1121, 7
        %v1123 = vsub.s32 %v1120, %v1122
        %v1124 = vrot.slane %v1116, %v1123
        %v1126 = vunpack.c.l.s4 1966171168
        %v1127 = vunpack.c.0.s8 %v1126
        %v1128 = vlaneseq
        %v1129 = vshrl.u32 %v1128, 7
        %v1130 = vsub.s32 %v1127, %v1129
        %v1131 = vrot.slane %v1117, %v1130
        %v1132 = vlaneseq
        %v1133 = vshrl.u32 %v1132, 7
        %v1134 = vsub.s32 0, %v1133
        %v1135 = vrot.slane %v1124, %v1134
        %v1136 = vlaneseq
        %v1137 = vshrl.u32 %v1136, 7
        %v1138 = vsub.s32 0, %v1137
        %v1139 = vrot.slane %v1131, %v1138
        %v1142 = vadd.f32 %v836, %v1135
        %v1143 = vadd.f32 %v841, %v1139
        %v1144 = vmul.f32 %v1142, 0.125
        %v1145 = vmul.f32 %v1143, 0.125
        %1147 = vset.pattern.permute.xlu0 0
        %1148 = vperm.xlu0 %1147, %v676
        %v1149 = vpop.permute.xlu0 %1148
        %1152 = vset.pattern.permute.xlu0 0
        %1153 = vperm.xlu0 %1152, %v681
        %v1154 = vpop.permute.xlu0 %1153
        %v1156 = vadd.f32 %v521, %v1149
        %v1157 = vadd.f32 %v522, %v1154
        %1159 = vset.pattern.permute.xlu0 0
        %1160 = vperm.xlu0 %1159, %v921
        %v1161 = vpop.permute.xlu0 %1160
        %v1162 = vlaneseq
        %v1163 = vshrl.u32 %v1162, 7
        %v1164 = vsub.s32 0, %v1163
        %v1165 = vrot.slane %v1161, %v1164
        %v1166 = vlaneseq
        %v1167 = vshrl.u32 %v1166, 7
        %v1168 = vsub.s32 1, %v1167
        %v1169 = vrot.slane %v1161, %v1168
        %v1172 = vadd.f32 %v676, %v1165
        %v1173 = vadd.f32 %v681, %v1169
        %1176 = vset.pattern.permute.xlu0 0
        %1177 = vperm.xlu0 %1176, %v1172
        %v1178 = vpop.permute.xlu0 %1177
        %1179 = vset.pattern.permute.xlu0 0
        %1180 = vperm.xlu0 %1179, %v1173
        %v1181 = vpop.permute.xlu0 %1180
        %v1182 = vlaneseq
        %v1183 = vshrl.u32 %v1182, 7
        %v1184 = vsub.s32 %v415, %v1183
        %v1185 = vrot.slane %v1178, %v1184
        %v1186 = vlaneseq
        %v1187 = vshrl.u32 %v1186, 7
        %v1188 = vsub.s32 %v415, %v1187
        %v1189 = vrot.slane %v1181, %v1188
        %vm1190 = vcmask 1042434
        %v1191 = vsel %vm1190, %v1185, %v1185
        %vm1192 = vcmask 1043459
        %v1193 = vsel %vm1192, %v1185, %v1191
        %vm1194 = vcmask 1044484
        %v1195 = vsel %vm1194, %v1185, %v1193
        %vm1196 = vcmask 1045509
        %v1197 = vsel %vm1196, %v1185, %v1195
        %vm1198 = vcmask 1046534
        %v1199 = vsel %vm1198, %v1185, %v1197
        %vm1200 = vcmask 1047559
        %v1201 = vsel %vm1200, %v1185, %v1199
        %v1202 = vsel %vm1190, %v1189, %v1189
        %v1203 = vsel %vm1192, %v1189, %v1202
        %v1204 = vsel %vm1194, %v1189, %v1203
        %v1205 = vsel %vm1196, %v1189, %v1204
        %v1206 = vsel %vm1198, %v1189, %v1205
        %v1207 = vsel %vm1200, %v1189, %v1206
        %v1210 = vadd.f32 %v1156, %v1201
        %v1211 = vadd.f32 %v1157, %v1207
        %1212 = vset.pattern.permute.xlu0 1
        %1213 = vperm.xlu0 %1212, %v676
        %v1214 = vpop.permute.xlu0 %1213
        %1216 = vset.pattern.permute.xlu0 1
        %1217 = vperm.xlu0 %1216, %v681
        %v1218 = vpop.permute.xlu0 %1217
        %v1220 = vadd.f32 %v527, %v1214
        %v1221 = vadd.f32 %v528, %v1218
        %1222 = vset.pattern.permute.xlu0 1
        %1223 = vperm.xlu0 %1222, %v921
        %v1224 = vpop.permute.xlu0 %1223
        %v1225 = vlaneseq
        %v1226 = vshrl.u32 %v1225, 7
        %v1227 = vsub.s32 0, %v1226
        %v1228 = vrot.slane %v1224, %v1227
        %v1229 = vlaneseq
        %v1230 = vshrl.u32 %v1229, 7
        %v1231 = vsub.s32 1, %v1230
        %v1232 = vrot.slane %v1224, %v1231
        %v1235 = vadd.f32 %v676, %v1228
        %v1236 = vadd.f32 %v681, %v1232
        %1239 = vset.pattern.permute.xlu0 1
        %1240 = vperm.xlu0 %1239, %v1235
        %v1241 = vpop.permute.xlu0 %1240
        %1242 = vset.pattern.permute.xlu0 1
        %1243 = vperm.xlu0 %1242, %v1236
        %v1244 = vpop.permute.xlu0 %1243
        %v1245 = vlaneseq
        %v1246 = vshrl.u32 %v1245, 7
        %v1247 = vsub.s32 %v415, %v1246
        %v1248 = vrot.slane %v1241, %v1247
        %v1249 = vlaneseq
        %v1250 = vshrl.u32 %v1249, 7
        %v1251 = vsub.s32 %v415, %v1250
        %v1252 = vrot.slane %v1244, %v1251
        %v1253 = vsel %vm1190, %v1248, %v1248
        %v1254 = vsel %vm1192, %v1248, %v1253
        %v1255 = vsel %vm1194, %v1248, %v1254
        %v1256 = vsel %vm1196, %v1248, %v1255
        %v1257 = vsel %vm1198, %v1248, %v1256
        %v1258 = vsel %vm1200, %v1248, %v1257
        %v1259 = vsel %vm1190, %v1252, %v1252
        %v1260 = vsel %vm1192, %v1252, %v1259
        %v1261 = vsel %vm1194, %v1252, %v1260
        %v1262 = vsel %vm1196, %v1252, %v1261
        %v1263 = vsel %vm1198, %v1252, %v1262
        %v1264 = vsel %vm1200, %v1252, %v1263
        %v1267 = vadd.f32 %v1220, %v1258
        %v1268 = vadd.f32 %v1221, %v1264
        %1269 = vset.pattern.permute.xlu0 2
        %1270 = vperm.xlu0 %1269, %v676
        %v1271 = vpop.permute.xlu0 %1270
        %1273 = vset.pattern.permute.xlu0 2
        %1274 = vperm.xlu0 %1273, %v681
        %v1275 = vpop.permute.xlu0 %1274
        %v1277 = vadd.f32 %v533, %v1271
        %v1278 = vadd.f32 %v534, %v1275
        %1279 = vset.pattern.permute.xlu0 2
        %1280 = vperm.xlu0 %1279, %v921
        %v1281 = vpop.permute.xlu0 %1280
        %v1282 = vlaneseq
        %v1283 = vshrl.u32 %v1282, 7
        %v1284 = vsub.s32 0, %v1283
        %v1285 = vrot.slane %v1281, %v1284
        %v1286 = vlaneseq
        %v1287 = vshrl.u32 %v1286, 7
        %v1288 = vsub.s32 1, %v1287
        %v1289 = vrot.slane %v1281, %v1288
        %v1292 = vadd.f32 %v676, %v1285
        %v1293 = vadd.f32 %v681, %v1289
        %1296 = vset.pattern.permute.xlu0 2
        %1297 = vperm.xlu0 %1296, %v1292
        %v1298 = vpop.permute.xlu0 %1297
        %1299 = vset.pattern.permute.xlu0 2
        %1300 = vperm.xlu0 %1299, %v1293
        %v1301 = vpop.permute.xlu0 %1300
        %v1302 = vlaneseq
        %v1303 = vshrl.u32 %v1302, 7
        %v1304 = vsub.s32 %v415, %v1303
        %v1305 = vrot.slane %v1298, %v1304
        %v1306 = vlaneseq
        %v1307 = vshrl.u32 %v1306, 7
        %v1308 = vsub.s32 %v415, %v1307
        %v1309 = vrot.slane %v1301, %v1308
        %v1310 = vsel %vm1190, %v1305, %v1305
        %v1311 = vsel %vm1192, %v1305, %v1310
        %v1312 = vsel %vm1194, %v1305, %v1311
        %v1313 = vsel %vm1196, %v1305, %v1312
        %v1314 = vsel %vm1198, %v1305, %v1313
        %v1315 = vsel %vm1200, %v1305, %v1314
        %v1316 = vsel %vm1190, %v1309, %v1309
        %v1317 = vsel %vm1192, %v1309, %v1316
        %v1318 = vsel %vm1194, %v1309, %v1317
        %v1319 = vsel %vm1196, %v1309, %v1318
        %v1320 = vsel %vm1198, %v1309, %v1319
        %v1321 = vsel %vm1200, %v1309, %v1320
        %v1324 = vadd.f32 %v1277, %v1315
        %v1325 = vadd.f32 %v1278, %v1321
        %1326 = vset.pattern.permute.xlu0 3
        %1327 = vperm.xlu0 %1326, %v676
        %v1328 = vpop.permute.xlu0 %1327
        %1330 = vset.pattern.permute.xlu0 3
        %1331 = vperm.xlu0 %1330, %v681
        %v1332 = vpop.permute.xlu0 %1331
        %v1334 = vadd.f32 %v539, %v1328
        %v1335 = vadd.f32 %v540, %v1332
        %1336 = vset.pattern.permute.xlu0 3
        %1337 = vperm.xlu0 %1336, %v921
        %v1338 = vpop.permute.xlu0 %1337
        %v1339 = vlaneseq
        %v1340 = vshrl.u32 %v1339, 7
        %v1341 = vsub.s32 0, %v1340
        %v1342 = vrot.slane %v1338, %v1341
        %v1343 = vlaneseq
        %v1344 = vshrl.u32 %v1343, 7
        %v1345 = vsub.s32 1, %v1344
        %v1346 = vrot.slane %v1338, %v1345
        %v1349 = vadd.f32 %v676, %v1342
        %v1350 = vadd.f32 %v681, %v1346
        %1353 = vset.pattern.permute.xlu0 3
        %1354 = vperm.xlu0 %1353, %v1349
        %v1355 = vpop.permute.xlu0 %1354
        %1356 = vset.pattern.permute.xlu0 3
        %1357 = vperm.xlu0 %1356, %v1350
        %v1358 = vpop.permute.xlu0 %1357
        %v1359 = vlaneseq
        %v1360 = vshrl.u32 %v1359, 7
        %v1361 = vsub.s32 %v415, %v1360
        %v1362 = vrot.slane %v1355, %v1361
        %v1363 = vlaneseq
        %v1364 = vshrl.u32 %v1363, 7
        %v1365 = vsub.s32 %v415, %v1364
        %v1366 = vrot.slane %v1358, %v1365
        %v1367 = vsel %vm1190, %v1362, %v1362
        %v1368 = vsel %vm1192, %v1362, %v1367
        %v1369 = vsel %vm1194, %v1362, %v1368
        %v1370 = vsel %vm1196, %v1362, %v1369
        %v1371 = vsel %vm1198, %v1362, %v1370
        %v1372 = vsel %vm1200, %v1362, %v1371
        %v1373 = vsel %vm1190, %v1366, %v1366
        %v1374 = vsel %vm1192, %v1366, %v1373
        %v1375 = vsel %vm1194, %v1366, %v1374
        %v1376 = vsel %vm1196, %v1366, %v1375
        %v1377 = vsel %vm1198, %v1366, %v1376
        %v1378 = vsel %vm1200, %v1366, %v1377
        %v1381 = vadd.f32 %v1334, %v1372
        %v1382 = vadd.f32 %v1335, %v1378
        %1385 = vrot.lane.b32.xlu0 %v1267, 8
        %v1386 = vpop.permute.xlu0 %1385
        %1387 = vrot.lane.b32.xlu0 %v1268, 8
        %v1388 = vpop.permute.xlu0 %1387
        %1393 = vrot.lane.b32.xlu0 %v1324, 16
        %v1394 = vpop.permute.xlu0 %1393
        %1395 = vrot.lane.b32.xlu0 %v1325, 16
        %v1396 = vpop.permute.xlu0 %1395
        %1401 = vrot.lane.b32.xlu0 %v1381, 24
        %v1402 = vpop.permute.xlu0 %1401
        %1403 = vrot.lane.b32.xlu0 %v1382, 24
        %v1404 = vpop.permute.xlu0 %1403
        %v1407 = vsel %vm421, %v1210, %v1386
        %v1408 = vsel %vm421, %v1211, %v1388
        %vm1409 = vcmask 130048
        %v1410 = vsel %vm1409, %v1407, %v1394
        %v1411 = vsel %vm1409, %v1408, %v1396
        %vm1412 = vcmask 195584
        %v1413 = vsel %vm1412, %v1410, %v1402
        %v1414 = vsel %vm1412, %v1411, %v1404
        %1417 = vrot.lane.b32.xlu0 %v1144, 122
        %v1418 = vpop.permute.xlu0 %1417
        %1419 = vrot.lane.b32.xlu0 %v1145, 122
        %v1420 = vpop.permute.xlu0 %1419
        %1423 = vrot.lane.b32.xlu0 %v1144, 116
        %v1424 = vpop.permute.xlu0 %1423
        %1425 = vrot.lane.b32.xlu0 %v1145, 116
        %v1426 = vpop.permute.xlu0 %1425
        %1429 = vrot.lane.b32.xlu0 %v1144, 110
        %v1430 = vpop.permute.xlu0 %1429
        %1431 = vrot.lane.b32.xlu0 %v1145, 110
        %v1432 = vpop.permute.xlu0 %1431
        %vm1435 = vcmask 261120
        %1436 = vst.msk [vmem:[%s384] sm:$0xff] %vm1435, %v1413
        %1437 = vst.msk [vmem:[%s384 + $0x8] sm:$0xff] %vm1435, %v1414
        %v1439 = vsel %vm1435, %v1413, 0
        %1441 = vmatprep.subr.mxu0 0.0
        %1442 = vmatpush1.msra.mxu0 %v1144
        %1443 = vmatprep.subr.mxu0 0.0
        %1444 = vmatpush1.msra.mxu0 %v1418
        %1445 = vmatprep.subr.mxu0 0.0
        %1446 = vmatpush1.msra.mxu0 %v1424
        %1447 = vmatprep.subr.mxu0 0.0
        %1448 = vmatpush1.msra.mxu0 %v1430
        %1449 = vmatprep.subr.mxu0 0.0
        %1450 = vmatpush1.msra.mxu0 0.0
        %1451 = vmatprep.subr.mxu0 0.0
        %1452 = vmatpush1.msra.mxu0 0.0
        %1453 = vmatprep.subr.mxu0 0.0
        %1454 = vmatpush1.msra.mxu0 0.0
        %1455 = vmatprep.subr.mxu0 0.0
        %1456 = vmatpush1.msra.mxu0 0.0
        %1457 = vmatprep.subr.mxu0 0.0
        %1458 = vmatpush1.msra.mxu0 0.0
        %1459 = vmatprep.subr.mxu0 0.0
        %1460 = vmatpush1.msra.mxu0 0.0
        %1461 = vmatprep.subr.mxu0 0.0
        %1462 = vmatpush1.msra.mxu0 0.0
        %1463 = vmatprep.subr.mxu0 0.0
        %1464 = vmatpush1.msra.mxu0 0.0
        %1465 = vmatprep.subr.mxu0 0.0
        %1466 = vmatpush1.msra.mxu0 0.0
        %1467 = vmatprep.subr.mxu0 0.0
        %1468 = vmatpush1.msra.mxu0 0.0
        %1469 = vmatprep.subr.mxu0 0.0
        %1470 = vmatpush1.msra.mxu0 0.0
        %1471 = vmatprep.subr.mxu0 0.0
        %1472 = vmatpush1.msra.mxu0 0.0
        %1473 = vmatprep.subr.mxu0 0.0
        %1474 = vmatpush1.msra.mxu0 0.0
        %1475 = vmatprep.subr.mxu0 0.0
        %1476 = vmatpush1.msra.mxu0 0.0
        %1477 = vmatprep.subr.mxu0 0.0
        %1478 = vmatpush1.msra.mxu0 0.0
        %1479 = vmatprep.subr.mxu0 0.0
        %1480 = vmatpush1.msra.mxu0 0.0
        %1481 = vmatprep.subr.mxu0 0.0
        %1482 = vmatpush1.msra.mxu0 0.0
        %1483 = vmatprep.subr.mxu0 0.0
        %1484 = vmatpush1.msra.mxu0 0.0
        %1485 = vmatprep.subr.mxu0 0.0
        %1486 = vmatpush1.msra.mxu0 0.0
        %1487 = vmatprep.subr.mxu0 0.0
        %1488 = vmatpush1.msra.mxu0 0.0
        %1489 = vmatprep.subr.mxu0 0.0
        %1490 = vmatpush1.msra.mxu0 0.0
        %1491 = vmatprep.subr.mxu0 0.0
        %1492 = vmatpush1.msra.mxu0 0.0
        %1493 = vmatprep.subr.mxu0 0.0
        %1494 = vmatpush1.msra.mxu0 0.0
        %1495 = vmatprep.subr.mxu0 0.0
        %1496 = vmatpush1.msra.mxu0 0.0
        %1497 = vmatprep.subr.mxu0 0.0
        %1498 = vmatpush1.msra.mxu0 0.0
        %1499 = vmatprep.subr.mxu0 0.0
        %1500 = vmatpush1.msra.mxu0 0.0
        %1501 = vmatprep.subr.mxu0 0.0
        %1502 = vmatpush1.msra.mxu0 0.0
        %1503 = vmatprep.subr.mxu0 0.0
        %1504 = vmatpush1.msra.mxu0 0.0
        %1505 = vmatprep.mubr.f32.mxu0 0.0
        %1506 = vmatmul.mubr.f32.gmra.mrb[0].mxu0 %v1439
        %v1507 = vpop.f32.mrb[0].mxu0
        %v1508 = vadd.f32 0.0, %v1507
        %v1509 = vpop.f32.mrb[0].mxu0
        %1510 = vdwg.mxu0
        %v1512 = vsel %vm1435, %v1414, 0
        %1514 = vmatprep.subr.mxu0 0.0
        %1515 = vmatpush1.msra.mxu0 %v1145
        %1516 = vmatprep.subr.mxu0 0.0
        %1517 = vmatpush1.msra.mxu0 %v1420
        %1518 = vmatprep.subr.mxu0 0.0
        %1519 = vmatpush1.msra.mxu0 %v1426
        %1520 = vmatprep.subr.mxu0 0.0
        %1521 = vmatpush1.msra.mxu0 %v1432
        %1522 = vmatprep.subr.mxu0 0.0
        %1523 = vmatpush1.msra.mxu0 0.0
        %1524 = vmatprep.subr.mxu0 0.0
        %1525 = vmatpush1.msra.mxu0 0.0
        %1526 = vmatprep.subr.mxu0 0.0
        %1527 = vmatpush1.msra.mxu0 0.0
        %1528 = vmatprep.subr.mxu0 0.0
        %1529 = vmatpush1.msra.mxu0 0.0
        %1530 = vmatprep.subr.mxu0 0.0
        %1531 = vmatpush1.msra.mxu0 0.0
        %1532 = vmatprep.subr.mxu0 0.0
        %1533 = vmatpush1.msra.mxu0 0.0
        %1534 = vmatprep.subr.mxu0 0.0
        %1535 = vmatpush1.msra.mxu0 0.0
        %1536 = vmatprep.subr.mxu0 0.0
        %1537 = vmatpush1.msra.mxu0 0.0
        %1538 = vmatprep.subr.mxu0 0.0
        %1539 = vmatpush1.msra.mxu0 0.0
        %1540 = vmatprep.subr.mxu0 0.0
        %1541 = vmatpush1.msra.mxu0 0.0
        %1542 = vmatprep.subr.mxu0 0.0
        %1543 = vmatpush1.msra.mxu0 0.0
        %1544 = vmatprep.subr.mxu0 0.0
        %1545 = vmatpush1.msra.mxu0 0.0
        %1546 = vmatprep.subr.mxu0 0.0
        %1547 = vmatpush1.msra.mxu0 0.0
        %1548 = vmatprep.subr.mxu0 0.0
        %1549 = vmatpush1.msra.mxu0 0.0
        %1550 = vmatprep.subr.mxu0 0.0
        %1551 = vmatpush1.msra.mxu0 0.0
        %1552 = vmatprep.subr.mxu0 0.0
        %1553 = vmatpush1.msra.mxu0 0.0
        %1554 = vmatprep.subr.mxu0 0.0
        %1555 = vmatpush1.msra.mxu0 0.0
        %1556 = vmatprep.subr.mxu0 0.0
        %1557 = vmatpush1.msra.mxu0 0.0
        %1558 = vmatprep.subr.mxu0 0.0
        %1559 = vmatpush1.msra.mxu0 0.0
        %1560 = vmatprep.subr.mxu0 0.0
        %1561 = vmatpush1.msra.mxu0 0.0
        %1562 = vmatprep.subr.mxu0 0.0
        %1563 = vmatpush1.msra.mxu0 0.0
        %1564 = vmatprep.subr.mxu0 0.0
        %1565 = vmatpush1.msra.mxu0 0.0
        %1566 = vmatprep.subr.mxu0 0.0
        %1567 = vmatpush1.msra.mxu0 0.0
        %1568 = vmatprep.subr.mxu0 0.0
        %1569 = vmatpush1.msra.mxu0 0.0
        %1570 = vmatprep.subr.mxu0 0.0
        %1571 = vmatpush1.msra.mxu0 0.0
        %1572 = vmatprep.subr.mxu0 0.0
        %1573 = vmatpush1.msra.mxu0 0.0
        %1574 = vmatprep.subr.mxu0 0.0
        %1575 = vmatpush1.msra.mxu0 0.0
        %1576 = vmatprep.subr.mxu0 0.0
        %1577 = vmatpush1.msra.mxu0 0.0
        %1578 = vmatprep.mubr.f32.mxu0 0.0
        %1579 = vmatmul.mubr.f32.gmra.mrb[0].mxu0 %v1512
        %v1580 = vpop.f32.mrb[0].mxu0
        %v1581 = vadd.f32 0.0, %v1580
        %v1582 = vpop.f32.mrb[0].mxu0
        %1583 = vdwg.mxu0
        %v1584 = vadd.f32 %v1107, %v1508
        %v1585 = vadd.f32 %v1108, %v1581
        %vm1586 = vcmask 48128
        %1587 = vst.msk [vmem:[%s410] sm:$0xff] %vm1586, %v1584
        %1588 = vst.msk [vmem:[%s410 + $0x8] sm:$0xff] %vm1586, %v1585
        %s1589 = sand.u32 %s233, 1
        %s1590 = scalar_lea.sflag [#allocation3], %s1589
        %s1591 = sand.u32 %s233, 1
        %s1592 = smul.addr %s1591, 16
        %s1593 = scalar_lea.vmem [#allocation5], %s1592
        %s1594 = smul.u32 2, %s26
        %p1595 = scmp.lt.s32.totalorder %s1594, 3
        %s1596 = scalar_select %p1595, %s1594, 3
        %s1597 = smul.addr %s1596, 8
        %s1598 = scalar_lea.vmem %s10, %s1597
        // Predicated region
        $region61: #{tpu_custom_call.1} parent=55 // pred_check
          %p1599 = pneg %p243
        $region62: #{tpu_custom_call.1} parent=55 // pred_check_branch
          %1601 = sbr.rel (%p1599) target = $region64
        $region63: #{tpu_custom_call.1} parent=55 // pred_region
          %s1602 = smul.u32 2, %s26
          %s1604 = ssub.s32 256, 256
          %1605 = vsyncadd %s1590, %s1604
          %s1606 = smul.addr %s1602, 128
          %s1607 = scalar_lea.hbm %s9, %s1606
          %s1608 = sshll.u32 %s1593, 4
          %s1609 = int_to_ptr.vmem [resolvable:$true] %s1608
          %1614 = dma.vmem_to_hbm [thread:$0]  %s1609, 256, %s1607, %s1590, 128, 128, 8
        $region64: #{tpu_custom_call.1} parent=55 // pred_fallthru
          _
        // Predicated region
        $region65: #{tpu_custom_call.1} parent=55 // pred_check
          %p1615 = pneg %p269
        $region66: #{tpu_custom_call.1} parent=55 // pred_check_branch
          %1617 = sbr.rel (%p1615) target = $region68
        $region67: #{tpu_custom_call.1} parent=55 // pred_region
          %s1618 = smul.u32 2, %s26
        $region68: #{tpu_custom_call.1} parent=55 // pred_fallthru
          _
      $region56: #{tpu_custom_call.1} parent=5 // pred_fallthru
        _
      %p1619 = scmp.le.s32.totalorder 2, %s21
      // Predicated region
      $region69: #{tpu_custom_call.1} parent=5 // pred_check
        %p1620 = pneg %p1619
      $region70: #{tpu_custom_call.1} parent=5 // pred_check_branch
        %1622 = sbr.rel (%p1620) target = $region72
      $region71: #{tpu_custom_call.1} parent=5 // pred_region
        %s1623 = ssub.s32 %s21, 2
        // Predicated region
        $region73: #{tpu_custom_call.1} parent=71 // pred_check
          %p1624 = pneg %p249
        $region74: #{tpu_custom_call.1} parent=71 // pred_check_branch
          %1626 = sbr.rel (%p1624) target = $region76
        $region75: #{tpu_custom_call.1} parent=71 // pred_region
          %s1627 = sand.u32 %s234, 1
          %s1628 = scalar_lea.sflag [#allocation3], %s1627
          %s1629 = sand.u32 %s234, 1
          %s1630 = smul.addr %s1629, 16
          %s1631 = scalar_lea.vmem [#allocation5], %s1630
          %1632 = dma.done %s1628, 256
        $region76: #{tpu_custom_call.1} parent=71 // pred_fallthru
          _
        // Predicated region
        $region77: #{tpu_custom_call.1} parent=71 // pred_check
          %p1633 = pneg %p275
        $region78: #{tpu_custom_call.1} parent=71 // pred_check_branch
          %1635 = sbr.rel (%p1633) target = $region80
        $region79: #{tpu_custom_call.1} parent=71 // pred_region
          %s1636 = smul.u32 2, %s27
          %p1637 = scmp.lt.s32.totalorder %s1636, 3
          %s1638 = scalar_select %p1637, %s1636, 3
          %s1639 = smul.addr %s1638, 8
          %s1640 = scalar_lea.vmem %s10, %s1639
        $region80: #{tpu_custom_call.1} parent=71 // pred_fallthru
          _
      $region72: #{tpu_custom_call.1} parent=5 // pred_fallthru
        _
    $region6: #{tpu_custom_call.1} parent=1 // loop_footer
      %s25 = sadd.s32 1, %s21
    $region7: #{tpu_custom_call.1} parent=1 // loop_footer_branch
      %20 = sbr.rel target = $region3
    $region8: #{tpu_custom_call.1} parent=1 // loop_exit
      _
    %1641 = vsyncpa [#allocation3], 1
    %s1642 = scalar_lea.sflag [#allocation3], 1
    %1643 = vsyncpa %s1642, 1
    %1644 = vsyncpa [#allocation4], 1
    %s1645 = scalar_lea.sflag [#allocation4], 1
    %1646 = vsyncpa %s1645, 1

</llo_original>
